<compile_context>
chip_gen: v6e
topology: v6e:2x2x1
jax: 0.10.0
libtpu: 0.0.40
codegen_flags: <defaults>
</compile_context>

<pallas_src>
import jax
import jax.numpy as jnp
from jax.experimental import pallas as pl
from jax.experimental.pallas import tpu as pltpu
import numpy as np

# ----------------------------- configuration --------------------------------
N_CLASSES   = 6
WINDOW_LEN  = 8      # sequence length T
INPUT_SIZE  = 6      # input_size fixed by the dataset
RNN_UNITS   = 32     # hidden size H ; 4H = 128 = exactly one lane dimension
DENSE_UNITS = 32
BATCH       = 16     # demo batch
LANE        = 128    # padded output width (lane-dense store)
GATES       = 4 * RNN_UNITS   # 128, fused gate width [i|f|g|o]


# ------------------------------- kernel -------------------------------------
def lstm_forward_kernel(gi_ref,     # (T, B_TILE, 128) fused input proj + fused bias
                        w_hh_ref,   # (H, 128)         fused recurrent weights [i|f|g|o]
                        w_d_ref,    # (H, DD)          dense weight (in, out)
                        b_d_ref,    # (1, DD)
                        w_o_ref,    # (DD, 128)        zero-padded output weight
                        b_o_ref,    # (1, 128)         zero-padded output bias
                        out_ref):   # (B_TILE, 128)    padded logits
    T, B, _ = gi_ref.shape
    H = w_hh_ref.shape[0]

    w_hh = w_hh_ref[...]                       # hoist the fused weight load
    h = jnp.zeros((B, H), jnp.float32)
    c = jnp.zeros((B, H), jnp.float32)

    # Fully unrolled serial recurrence (T=8 static): per step one lane-dense
    # (B,32)@(32,128) MXU matmul, one full-vreg sigmoid + one full-vreg tanh,
    # then static lane slices for the individual gates.
    for t in range(T):
        pre = gi_ref[t] + jnp.dot(h, w_hh, preferred_element_type=jnp.float32)
        sg = jax.nn.sigmoid(pre)               # gates i, f, o
        th = jnp.tanh(pre)                     # gate g
        i_g = sg[:, 0 * H:1 * H]
        f_g = sg[:, 1 * H:2 * H]
        g_g = th[:, 2 * H:3 * H]
        o_g = sg[:, 3 * H:4 * H]
        c = f_g * c + i_g * g_g
        h = o_g * jnp.tanh(c)

    # Dense -> ReLU -> (Dropout = identity in eval) -> output Linear (logits).
    d = jnp.maximum(
        jnp.dot(h, w_d_ref[...], preferred_element_type=jnp.float32) + b_d_ref[...],
        0.0)
    out_ref[...] = (jnp.dot(d, w_o_ref[...], preferred_element_type=jnp.float32)
                    + b_o_ref[...])


# --------------------------- parameter plumbing ------------------------------
def _prep_params(p):
    """PyTorch layout -> fused kernel layout (gate-fused slabs, padded output)."""
    DD, C = DENSE_UNITS, N_CLASSES
    w_ih_f = p["w_ih"].T                       # (D, 4H), columns in order i|f|g|o
    w_hh_f = p["w_hh"].T                       # (H, 4H)
    b_f = p["b_ih"] + p["b_hh"]                # (4H,) fused biases
    w_d = p["w_d"].T                           # (H, DD)
    b_d = p["b_d"].reshape(1, DD)
    w_o = jnp.zeros((DD, LANE), jnp.float32).at[:, :C].set(p["w_o"].T)
    b_o = jnp.zeros((1, LANE), jnp.float32).at[:, :C].set(p["b_o"].reshape(1, C))
    return w_ih_f, w_hh_f, b_f, w_d, b_d, w_o, b_o


def _batch_tiling(B):
    """Pick (B_TILE, n_tiles): one grid step for batches <= 256 rows (single-TC
    v5e/v6e optimum, avoids per-step grid overhead); otherwise <=256-row tiles
    with an even tile count so the 'parallel' axis balances both v7x TCs."""
    b8 = ((B + 7) // 8) * 8                    # sublane multiple
    if b8 <= 256:
        return b8, 1
    n = (b8 + 255) // 256
    if n % 2:
        n += 1
    bt = (((b8 + n - 1) // n + 7) // 8) * 8
    return bt, n


# ------------------------------- wrapper -------------------------------------
def lstm_model_forward(x, params):
    """x: (B, T, 6) float32, batch_first like PyTorch. Returns (B, n_classes) logits."""
    B, T, D = x.shape
    b_tile, n_tiles = _batch_tiling(B)
    B_pad = b_tile * n_tiles
    if B_pad != B:
        x = jnp.pad(x, ((0, B_pad - B), (0, 0), (0, 0)))

    w_ih_f, w_hh_f, b_f, w_d, b_d, w_o, b_o = _prep_params(params)
    H, DD = RNN_UNITS, DENSE_UNITS

    # Off-critical-path fused input projection as ONE XLA GEMM in the wrapper:
    # the Pallas body sees only lane-dense 128-wide blocks and keeps just the
    # serial recurrence + head.
    x_tm = jnp.transpose(x, (1, 0, 2))                               # (T, B_pad, 6)
    gi = jnp.einsum('tbd,dg->tbg', x_tm, w_ih_f) + b_f               # (T, B_pad, 128)
    gi = gi.astype(jnp.float32)

    def full(shape):
        return pl.BlockSpec(shape, lambda i: (0,) * len(shape))

    out_pad = pl.pallas_call(
        lstm_forward_kernel,
        out_shape=jax.ShapeDtypeStruct((B_pad, LANE), jnp.float32),
        grid_spec=pltpu.PrefetchScalarGridSpec(
            num_scalar_prefetch=0,
            grid=(n_tiles,),
            in_specs=[
                pl.BlockSpec((T, b_tile, GATES), lambda i: (0, i, 0)),  # gi tile
                full((H, GATES)),      # fused W_hh
                full((H, DD)),         # w_d
                full((1, DD)),         # b_d
                full((DD, LANE)),      # w_o (padded)
                full((1, LANE)),       # b_o (padded)
            ],
            out_specs=pl.BlockSpec((b_tile, LANE), lambda i: (i, 0)),
        ),
        compiler_params=pltpu.CompilerParams(
            dimension_semantics=("parallel",)),
    )(gi, w_hh_f, w_d, b_d, w_o, b_o)

    return out_pad[:B, :N_CLASSES]


# --------------------------- parameter creation ------------------------------
def init_params(key):
    H, D, DD, C = RNN_UNITS, INPUT_SIZE, DENSE_UNITS, N_CLASSES
    ks = jax.random.split(key, 8)
    u = lambda k, shape, s: jax.random.uniform(k, shape, jnp.float32, -s, s)
    kr = 1.0 / np.sqrt(H)
    kd = 1.0 / np.sqrt(H)
    ko = 1.0 / np.sqrt(DD)
    return {
        # nn.LSTM layout, gate order [i | f | g | o]
        "w_ih": u(ks[0], (4 * H, D), kr),
        "w_hh": u(ks[1], (4 * H, H), kr),
        "b_ih": u(ks[2], (4 * H,), kr),
        "b_hh": u(ks[3], (4 * H,), kr),
        # nn.Linear layout (out_features, in_features)
        "w_d": u(ks[4], (DD, H), kd),
        "b_d": u(ks[5], (DD,), kd),
        "w_o": u(ks[6], (C, DD), ko),
        "b_o": u(ks[7], (C,), ko),
    }


# ------------------------------ pure-JAX ref ----------------------------------
def reference_forward(x, p):
    B, T, _ = x.shape
    H = RNN_UNITS
    h = jnp.zeros((B, H), jnp.float32)
    c = jnp.zeros((B, H), jnp.float32)
    w_ih_t, w_hh_t = p["w_ih"].T, p["w_hh"].T
    for t in range(T):
        g = x[:, t, :] @ w_ih_t + p["b_ih"] + h @ w_hh_t + p["b_hh"]
        i = jax.nn.sigmoid(g[:, 0:H])
        f = jax.nn.sigmoid(g[:, H:2 * H])
        gg = jnp.tanh(g[:, 2 * H:3 * H])
        o = jax.nn.sigmoid(g[:, 3 * H:4 * H])
        c = f * c + i * gg
        h = o * jnp.tanh(c)
    d = jnp.maximum(h @ p["w_d"].T + p["b_d"], 0.0)
    return d @ p["w_o"].T + p["b_o"]


# ---------------------------------- main --------------------------------------
if __name__ == "__main__":
    key = jax.random.PRNGKey(0)
    k_x, k_p = jax.random.split(key)
    x = jax.random.normal(k_x, (BATCH, WINDOW_LEN, INPUT_SIZE), jnp.float32)
    params = init_params(k_p)

    out = lstm_model_forward(x, params)
    out = jax.block_until_ready(out)

    ref = reference_forward(x, params)
    assert out.shape == (BATCH, N_CLASSES)
    assert np.allclose(np.asarray(out), np.asarray(ref), atol=1e-3, rtol=1e-3)

    print("KERNEL_OK")
</pallas_src>

<mosaic_0001>
module attributes {stable_mosaic.version = 11 : i64} {
  func.func @lstm_forward_kernel(%arg0: i32, %arg1: memref<8x16x128xf32, #tpu.memory_space<vmem>>, %arg2: memref<32x128xf32, #tpu.memory_space<vmem>>, %arg3: memref<32x32xf32, #tpu.memory_space<vmem>>, %arg4: memref<1x32xf32, #tpu.memory_space<vmem>>, %arg5: memref<32x128xf32, #tpu.memory_space<vmem>>, %arg6: memref<1x128xf32, #tpu.memory_space<vmem>>, %arg7: memref<16x128xf32, #tpu.memory_space<vmem>>) attributes {dimension_semantics = [#tpu.dimension_semantics<parallel>], iteration_bounds = array<i64: 1>, scalar_prefetch = 0 : i64, scratch_operands = 0 : i64, tpu.core_type = #tpu.core_type<tc>, window_params = [{transform_indices = @transform_0, window_bounds = array<i64: 8, 16, 128>}, {pipeline_mode = #tpu.pipeline_mode<synchronous>, transform_indices = @transform_1, window_bounds = array<i64: 32, 128>}, {pipeline_mode = #tpu.pipeline_mode<synchronous>, transform_indices = @transform_2, window_bounds = array<i64: 32, 32>}, {pipeline_mode = #tpu.pipeline_mode<synchronous>, transform_indices = @transform_3, window_bounds = array<i64: 1, 32>}, {pipeline_mode = #tpu.pipeline_mode<synchronous>, transform_indices = @transform_4, window_bounds = array<i64: 32, 128>}, {pipeline_mode = #tpu.pipeline_mode<synchronous>, transform_indices = @transform_5, window_bounds = array<i64: 1, 128>}, {transform_indices = @transform_6, window_bounds = array<i64: 16, 128>}]} {
    %c0 = arith.constant 0 : index
    %c0_0 = arith.constant 0 : index
    %0 = vector.load %arg2[%c0, %c0_0] : memref<32x128xf32, #tpu.memory_space<vmem>>, vector<32x128xf32>
    %cst = arith.constant 0.000000e+00 : f32
    %1 = vector.broadcast %cst : f32 to vector<16x32xf32>
    %cst_1 = arith.constant 0.000000e+00 : f32
    %2 = vector.broadcast %cst_1 : f32 to vector<16x32xf32>
    %c0_2 = arith.constant 0 : index
    %c0_3 = arith.constant 0 : index
    %c0_4 = arith.constant 0 : index
    %3 = vector.load %arg1[%c0_2, %c0_3, %c0_4] : memref<8x16x128xf32, #tpu.memory_space<vmem>>, vector<1x16x128xf32>
    %4 = vector.shape_cast %3 : vector<1x16x128xf32> to vector<16x128xf32>
    %cst_5 = arith.constant dense<0.000000e+00> : vector<16x128xf32>
    %5 = tpu.matmul %1, %0, %cst_5 {dimension_numbers = #tpu.dot_dimension_numbers<[1], [0], [0], [1], [0, 0, 1, 1], [], []>} : vector<16x32xf32>, vector<32x128xf32>, vector<16x128xf32> -> vector<16x128xf32>
    %6 = arith.addf %4, %5 : vector<16x128xf32>
    %7 = arith.negf %6 : vector<16x128xf32>
    %8 = math.exp %7 : vector<16x128xf32>
    %cst_6 = arith.constant 1.000000e+00 : f32
    %9 = vector.broadcast %cst_6 : f32 to vector<16x128xf32>
    %10 = arith.addf %9, %8 : vector<16x128xf32>
    %11 = arith.divf %9, %10 : vector<16x128xf32>
    %12 = math.tanh %6 : vector<16x128xf32>
    %13 = vector.extract_strided_slice %11 {offsets = [0, 0], sizes = [16, 32], strides = [1, 1]} : vector<16x128xf32> to vector<16x32xf32>
    %14 = vector.extract_strided_slice %11 {offsets = [0, 32], sizes = [16, 32], strides = [1, 1]} : vector<16x128xf32> to vector<16x32xf32>
    %15 = vector.extract_strided_slice %12 {offsets = [0, 64], sizes = [16, 32], strides = [1, 1]} : vector<16x128xf32> to vector<16x32xf32>
    %16 = vector.extract_strided_slice %11 {offsets = [0, 96], sizes = [16, 32], strides = [1, 1]} : vector<16x128xf32> to vector<16x32xf32>
    %17 = arith.mulf %14, %2 : vector<16x32xf32>
    %18 = arith.mulf %13, %15 : vector<16x32xf32>
    %19 = arith.addf %17, %18 : vector<16x32xf32>
    %20 = math.tanh %19 : vector<16x32xf32>
    %21 = arith.mulf %16, %20 : vector<16x32xf32>
    %c1 = arith.constant 1 : index
    %c0_7 = arith.constant 0 : index
    %c0_8 = arith.constant 0 : index
    %22 = vector.load %arg1[%c1, %c0_7, %c0_8] : memref<8x16x128xf32, #tpu.memory_space<vmem>>, vector<1x16x128xf32>
    %23 = vector.shape_cast %22 : vector<1x16x128xf32> to vector<16x128xf32>
    %cst_9 = arith.constant dense<0.000000e+00> : vector<16x128xf32>
    %24 = tpu.matmul %21, %0, %cst_9 {dimension_numbers = #tpu.dot_dimension_numbers<[1], [0], [0], [1], [0, 0, 1, 1], [], []>} : vector<16x32xf32>, vector<32x128xf32>, vector<16x128xf32> -> vector<16x128xf32>
    %25 = arith.addf %23, %24 : vector<16x128xf32>
    %26 = arith.negf %25 : vector<16x128xf32>
    %27 = math.exp %26 : vector<16x128xf32>
    %cst_10 = arith.constant 1.000000e+00 : f32
    %28 = vector.broadcast %cst_10 : f32 to vector<16x128xf32>
    %29 = arith.addf %28, %27 : vector<16x128xf32>
    %30 = arith.divf %28, %29 : vector<16x128xf32>
    %31 = math.tanh %25 : vector<16x128xf32>
    %32 = vector.extract_strided_slice %30 {offsets = [0, 0], sizes = [16, 32], strides = [1, 1]} : vector<16x128xf32> to vector<16x32xf32>
    %33 = vector.extract_strided_slice %30 {offsets = [0, 32], sizes = [16, 32], strides = [1, 1]} : vector<16x128xf32> to vector<16x32xf32>
    %34 = vector.extract_strided_slice %31 {offsets = [0, 64], sizes = [16, 32], strides = [1, 1]} : vector<16x128xf32> to vector<16x32xf32>
    %35 = vector.extract_strided_slice %30 {offsets = [0, 96], sizes = [16, 32], strides = [1, 1]} : vector<16x128xf32> to vector<16x32xf32>
    %36 = arith.mulf %33, %19 : vector<16x32xf32>
    %37 = arith.mulf %32, %34 : vector<16x32xf32>
    %38 = arith.addf %36, %37 : vector<16x32xf32>
    %39 = math.tanh %38 : vector<16x32xf32>
    %40 = arith.mulf %35, %39 : vector<16x32xf32>
    %c2 = arith.constant 2 : index
    %c0_11 = arith.constant 0 : index
    %c0_12 = arith.constant 0 : index
    %41 = vector.load %arg1[%c2, %c0_11, %c0_12] : memref<8x16x128xf32, #tpu.memory_space<vmem>>, vector<1x16x128xf32>
    %42 = vector.shape_cast %41 : vector<1x16x128xf32> to vector<16x128xf32>
    %cst_13 = arith.constant dense<0.000000e+00> : vector<16x128xf32>
    %43 = tpu.matmul %40, %0, %cst_13 {dimension_numbers = #tpu.dot_dimension_numbers<[1], [0], [0], [1], [0, 0, 1, 1], [], []>} : vector<16x32xf32>, vector<32x128xf32>, vector<16x128xf32> -> vector<16x128xf32>
    %44 = arith.addf %42, %43 : vector<16x128xf32>
    %45 = arith.negf %44 : vector<16x128xf32>
    %46 = math.exp %45 : vector<16x128xf32>
    %cst_14 = arith.constant 1.000000e+00 : f32
    %47 = vector.broadcast %cst_14 : f32 to vector<16x128xf32>
    %48 = arith.addf %47, %46 : vector<16x128xf32>
    %49 = arith.divf %47, %48 : vector<16x128xf32>
    %50 = math.tanh %44 : vector<16x128xf32>
    %51 = vector.extract_strided_slice %49 {offsets = [0, 0], sizes = [16, 32], strides = [1, 1]} : vector<16x128xf32> to vector<16x32xf32>
    %52 = vector.extract_strided_slice %49 {offsets = [0, 32], sizes = [16, 32], strides = [1, 1]} : vector<16x128xf32> to vector<16x32xf32>
    %53 = vector.extract_strided_slice %50 {offsets = [0, 64], sizes = [16, 32], strides = [1, 1]} : vector<16x128xf32> to vector<16x32xf32>
    %54 = vector.extract_strided_slice %49 {offsets = [0, 96], sizes = [16, 32], strides = [1, 1]} : vector<16x128xf32> to vector<16x32xf32>
    %55 = arith.mulf %52, %38 : vector<16x32xf32>
    %56 = arith.mulf %51, %53 : vector<16x32xf32>
    %57 = arith.addf %55, %56 : vector<16x32xf32>
    %58 = math.tanh %57 : vector<16x32xf32>
    %59 = arith.mulf %54, %58 : vector<16x32xf32>
    %c3 = arith.constant 3 : index
    %c0_15 = arith.constant 0 : index
    %c0_16 = arith.constant 0 : index
    %60 = vector.load %arg1[%c3, %c0_15, %c0_16] : memref<8x16x128xf32, #tpu.memory_space<vmem>>, vector<1x16x128xf32>
    %61 = vector.shape_cast %60 : vector<1x16x128xf32> to vector<16x128xf32>
    %cst_17 = arith.constant dense<0.000000e+00> : vector<16x128xf32>
    %62 = tpu.matmul %59, %0, %cst_17 {dimension_numbers = #tpu.dot_dimension_numbers<[1], [0], [0], [1], [0, 0, 1, 1], [], []>} : vector<16x32xf32>, vector<32x128xf32>, vector<16x128xf32> -> vector<16x128xf32>
    %63 = arith.addf %61, %62 : vector<16x128xf32>
    %64 = arith.negf %63 : vector<16x128xf32>
    %65 = math.exp %64 : vector<16x128xf32>
    %cst_18 = arith.constant 1.000000e+00 : f32
    %66 = vector.broadcast %cst_18 : f32 to vector<16x128xf32>
    %67 = arith.addf %66, %65 : vector<16x128xf32>
    %68 = arith.divf %66, %67 : vector<16x128xf32>
    %69 = math.tanh %63 : vector<16x128xf32>
    %70 = vector.extract_strided_slice %68 {offsets = [0, 0], sizes = [16, 32], strides = [1, 1]} : vector<16x128xf32> to vector<16x32xf32>
    %71 = vector.extract_strided_slice %68 {offsets = [0, 32], sizes = [16, 32], strides = [1, 1]} : vector<16x128xf32> to vector<16x32xf32>
    %72 = vector.extract_strided_slice %69 {offsets = [0, 64], sizes = [16, 32], strides = [1, 1]} : vector<16x128xf32> to vector<16x32xf32>
    %73 = vector.extract_strided_slice %68 {offsets = [0, 96], sizes = [16, 32], strides = [1, 1]} : vector<16x128xf32> to vector<16x32xf32>
    %74 = arith.mulf %71, %57 : vector<16x32xf32>
    %75 = arith.mulf %70, %72 : vector<16x32xf32>
    %76 = arith.addf %74, %75 : vector<16x32xf32>
    %77 = math.tanh %76 : vector<16x32xf32>
    %78 = arith.mulf %73, %77 : vector<16x32xf32>
    %c4 = arith.constant 4 : index
    %c0_19 = arith.constant 0 : index
    %c0_20 = arith.constant 0 : index
    %79 = vector.load %arg1[%c4, %c0_19, %c0_20] : memref<8x16x128xf32, #tpu.memory_space<vmem>>, vector<1x16x128xf32>
    %80 = vector.shape_cast %79 : vector<1x16x128xf32> to vector<16x128xf32>
    %cst_21 = arith.constant dense<0.000000e+00> : vector<16x128xf32>
    %81 = tpu.matmul %78, %0, %cst_21 {dimension_numbers = #tpu.dot_dimension_numbers<[1], [0], [0], [1], [0, 0, 1, 1], [], []>} : vector<16x32xf32>, vector<32x128xf32>, vector<16x128xf32> -> vector<16x128xf32>
    %82 = arith.addf %80, %81 : vector<16x128xf32>
    %83 = arith.negf %82 : vector<16x128xf32>
    %84 = math.exp %83 : vector<16x128xf32>
    %cst_22 = arith.constant 1.000000e+00 : f32
    %85 = vector.broadcast %cst_22 : f32 to vector<16x128xf32>
    %86 = arith.addf %85, %84 : vector<16x128xf32>
    %87 = arith.divf %85, %86 : vector<16x128xf32>
    %88 = math.tanh %82 : vector<16x128xf32>
    %89 = vector.extract_strided_slice %87 {offsets = [0, 0], sizes = [16, 32], strides = [1, 1]} : vector<16x128xf32> to vector<16x32xf32>
    %90 = vector.extract_strided_slice %87 {offsets = [0, 32], sizes = [16, 32], strides = [1, 1]} : vector<16x128xf32> to vector<16x32xf32>
    %91 = vector.extract_strided_slice %88 {offsets = [0, 64], sizes = [16, 32], strides = [1, 1]} : vector<16x128xf32> to vector<16x32xf32>
    %92 = vector.extract_strided_slice %87 {offsets = [0, 96], sizes = [16, 32], strides = [1, 1]} : vector<16x128xf32> to vector<16x32xf32>
    %93 = arith.mulf %90, %76 : vector<16x32xf32>
    %94 = arith.mulf %89, %91 : vector<16x32xf32>
    %95 = arith.addf %93, %94 : vector<16x32xf32>
    %96 = math.tanh %95 : vector<16x32xf32>
    %97 = arith.mulf %92, %96 : vector<16x32xf32>
    %c5 = arith.constant 5 : index
    %c0_23 = arith.constant 0 : index
    %c0_24 = arith.constant 0 : index
    %98 = vector.load %arg1[%c5, %c0_23, %c0_24] : memref<8x16x128xf32, #tpu.memory_space<vmem>>, vector<1x16x128xf32>
    %99 = vector.shape_cast %98 : vector<1x16x128xf32> to vector<16x128xf32>
    %cst_25 = arith.constant dense<0.000000e+00> : vector<16x128xf32>
    %100 = tpu.matmul %97, %0, %cst_25 {dimension_numbers = #tpu.dot_dimension_numbers<[1], [0], [0], [1], [0, 0, 1, 1], [], []>} : vector<16x32xf32>, vector<32x128xf32>, vector<16x128xf32> -> vector<16x128xf32>
    %101 = arith.addf %99, %100 : vector<16x128xf32>
    %102 = arith.negf %101 : vector<16x128xf32>
    %103 = math.exp %102 : vector<16x128xf32>
    %cst_26 = arith.constant 1.000000e+00 : f32
    %104 = vector.broadcast %cst_26 : f32 to vector<16x128xf32>
    %105 = arith.addf %104, %103 : vector<16x128xf32>
    %106 = arith.divf %104, %105 : vector<16x128xf32>
    %107 = math.tanh %101 : vector<16x128xf32>
    %108 = vector.extract_strided_slice %106 {offsets = [0, 0], sizes = [16, 32], strides = [1, 1]} : vector<16x128xf32> to vector<16x32xf32>
    %109 = vector.extract_strided_slice %106 {offsets = [0, 32], sizes = [16, 32], strides = [1, 1]} : vector<16x128xf32> to vector<16x32xf32>
    %110 = vector.extract_strided_slice %107 {offsets = [0, 64], sizes = [16, 32], strides = [1, 1]} : vector<16x128xf32> to vector<16x32xf32>
    %111 = vector.extract_strided_slice %106 {offsets = [0, 96], sizes = [16, 32], strides = [1, 1]} : vector<16x128xf32> to vector<16x32xf32>
    %112 = arith.mulf %109, %95 : vector<16x32xf32>
    %113 = arith.mulf %108, %110 : vector<16x32xf32>
    %114 = arith.addf %112, %113 : vector<16x32xf32>
    %115 = math.tanh %114 : vector<16x32xf32>
    %116 = arith.mulf %111, %115 : vector<16x32xf32>
    %c6 = arith.constant 6 : index
    %c0_27 = arith.constant 0 : index
    %c0_28 = arith.constant 0 : index
    %117 = vector.load %arg1[%c6, %c0_27, %c0_28] : memref<8x16x128xf32, #tpu.memory_space<vmem>>, vector<1x16x128xf32>
    %118 = vector.shape_cast %117 : vector<1x16x128xf32> to vector<16x128xf32>
    %cst_29 = arith.constant dense<0.000000e+00> : vector<16x128xf32>
    %119 = tpu.matmul %116, %0, %cst_29 {dimension_numbers = #tpu.dot_dimension_numbers<[1], [0], [0], [1], [0, 0, 1, 1], [], []>} : vector<16x32xf32>, vector<32x128xf32>, vector<16x128xf32> -> vector<16x128xf32>
    %120 = arith.addf %118, %119 : vector<16x128xf32>
    %121 = arith.negf %120 : vector<16x128xf32>
    %122 = math.exp %121 : vector<16x128xf32>
    %cst_30 = arith.constant 1.000000e+00 : f32
    %123 = vector.broadcast %cst_30 : f32 to vector<16x128xf32>
    %124 = arith.addf %123, %122 : vector<16x128xf32>
    %125 = arith.divf %123, %124 : vector<16x128xf32>
    %126 = math.tanh %120 : vector<16x128xf32>
    %127 = vector.extract_strided_slice %125 {offsets = [0, 0], sizes = [16, 32], strides = [1, 1]} : vector<16x128xf32> to vector<16x32xf32>
    %128 = vector.extract_strided_slice %125 {offsets = [0, 32], sizes = [16, 32], strides = [1, 1]} : vector<16x128xf32> to vector<16x32xf32>
    %129 = vector.extract_strided_slice %126 {offsets = [0, 64], sizes = [16, 32], strides = [1, 1]} : vector<16x128xf32> to vector<16x32xf32>
    %130 = vector.extract_strided_slice %125 {offsets = [0, 96], sizes = [16, 32], strides = [1, 1]} : vector<16x128xf32> to vector<16x32xf32>
    %131 = arith.mulf %128, %114 : vector<16x32xf32>
    %132 = arith.mulf %127, %129 : vector<16x32xf32>
    %133 = arith.addf %131, %132 : vector<16x32xf32>
    %134 = math.tanh %133 : vector<16x32xf32>
    %135 = arith.mulf %130, %134 : vector<16x32xf32>
    %c7 = arith.constant 7 : index
    %c0_31 = arith.constant 0 : index
    %c0_32 = arith.constant 0 : index
    %136 = vector.load %arg1[%c7, %c0_31, %c0_32] : memref<8x16x128xf32, #tpu.memory_space<vmem>>, vector<1x16x128xf32>
    %137 = vector.shape_cast %136 : vector<1x16x128xf32> to vector<16x128xf32>
    %cst_33 = arith.constant dense<0.000000e+00> : vector<16x128xf32>
    %138 = tpu.matmul %135, %0, %cst_33 {dimension_numbers = #tpu.dot_dimension_numbers<[1], [0], [0], [1], [0, 0, 1, 1], [], []>} : vector<16x32xf32>, vector<32x128xf32>, vector<16x128xf32> -> vector<16x128xf32>
    %139 = arith.addf %137, %138 : vector<16x128xf32>
    %140 = arith.negf %139 : vector<16x128xf32>
    %141 = math.exp %140 : vector<16x128xf32>
    %cst_34 = arith.constant 1.000000e+00 : f32
    %142 = vector.broadcast %cst_34 : f32 to vector<16x128xf32>
    %143 = arith.addf %142, %141 : vector<16x128xf32>
    %144 = arith.divf %142, %143 : vector<16x128xf32>
    %145 = math.tanh %139 : vector<16x128xf32>
    %146 = vector.extract_strided_slice %144 {offsets = [0, 0], sizes = [16, 32], strides = [1, 1]} : vector<16x128xf32> to vector<16x32xf32>
    %147 = vector.extract_strided_slice %144 {offsets = [0, 32], sizes = [16, 32], strides = [1, 1]} : vector<16x128xf32> to vector<16x32xf32>
    %148 = vector.extract_strided_slice %145 {offsets = [0, 64], sizes = [16, 32], strides = [1, 1]} : vector<16x128xf32> to vector<16x32xf32>
    %149 = vector.extract_strided_slice %144 {offsets = [0, 96], sizes = [16, 32], strides = [1, 1]} : vector<16x128xf32> to vector<16x32xf32>
    %150 = arith.mulf %147, %133 : vector<16x32xf32>
    %151 = arith.mulf %146, %148 : vector<16x32xf32>
    %152 = arith.addf %150, %151 : vector<16x32xf32>
    %153 = math.tanh %152 : vector<16x32xf32>
    %154 = arith.mulf %149, %153 : vector<16x32xf32>
    %c0_35 = arith.constant 0 : index
    %c0_36 = arith.constant 0 : index
    %155 = vector.load %arg3[%c0_35, %c0_36] : memref<32x32xf32, #tpu.memory_space<vmem>>, vector<32x32xf32>
    %cst_37 = arith.constant dense<0.000000e+00> : vector<16x32xf32>
    %156 = tpu.matmul %154, %155, %cst_37 {dimension_numbers = #tpu.dot_dimension_numbers<[1], [0], [0], [1], [0, 0, 1, 1], [], []>} : vector<16x32xf32>, vector<32x32xf32>, vector<16x32xf32> -> vector<16x32xf32>
    %c0_38 = arith.constant 0 : index
    %c0_39 = arith.constant 0 : index
    %157 = vector.load %arg4[%c0_38, %c0_39] : memref<1x32xf32, #tpu.memory_space<vmem>>, vector<1x32xf32>
    %158 = vector.broadcast %157 : vector<1x32xf32> to vector<16x32xf32>
    %159 = arith.addf %156, %158 : vector<16x32xf32>
    %cst_40 = arith.constant 0.000000e+00 : f32
    %160 = vector.broadcast %cst_40 : f32 to vector<16x32xf32>
    %161 = arith.maximumf %159, %160 : vector<16x32xf32>
    %c0_41 = arith.constant 0 : index
    %c0_42 = arith.constant 0 : index
    %162 = vector.load %arg5[%c0_41, %c0_42] : memref<32x128xf32, #tpu.memory_space<vmem>>, vector<32x128xf32>
    %cst_43 = arith.constant dense<0.000000e+00> : vector<16x128xf32>
    %163 = tpu.matmul %161, %162, %cst_43 {dimension_numbers = #tpu.dot_dimension_numbers<[1], [0], [0], [1], [0, 0, 1, 1], [], []>} : vector<16x32xf32>, vector<32x128xf32>, vector<16x128xf32> -> vector<16x128xf32>
    %c0_44 = arith.constant 0 : index
    %c0_45 = arith.constant 0 : index
    %164 = vector.load %arg6[%c0_44, %c0_45] : memref<1x128xf32, #tpu.memory_space<vmem>>, vector<1x128xf32>
    %165 = vector.broadcast %164 : vector<1x128xf32> to vector<16x128xf32>
    %166 = arith.addf %163, %165 : vector<16x128xf32>
    %c0_46 = arith.constant 0 : index
    %c0_47 = arith.constant 0 : index
    %167 = vector.load %arg7[%c0_46, %c0_47] : memref<16x128xf32, #tpu.memory_space<vmem>>, vector<16x128xf32>
    tpu.vector_store %arg7[%c0_46, %c0_47], %166 {strides = array<i32>} : memref<16x128xf32, #tpu.memory_space<vmem>>, vector<16x128xf32>,
    return
  }
  func.func @transform_0(%arg0: i32) -> (i32, i32, i32) {
    %c0_i32 = arith.constant 0 : i32
    %c0_i32_0 = arith.constant 0 : i32
    %c0_i32_1 = arith.constant 0 : i32
    return %c0_i32, %arg0, %c0_i32_0 : i32, i32, i32
  }
  func.func @transform_1(%arg0: i32) -> (i32, i32) {
    %c0_i32 = arith.constant 0 : i32
    %c0_i32_0 = arith.constant 0 : i32
    %c0_i32_1 = arith.constant 0 : i32
    return %c0_i32, %c0_i32_0 : i32, i32
  }
  func.func @transform_2(%arg0: i32) -> (i32, i32) {
    %c0_i32 = arith.constant 0 : i32
    %c0_i32_0 = arith.constant 0 : i32
    %c0_i32_1 = arith.constant 0 : i32
    return %c0_i32, %c0_i32_0 : i32, i32
  }
  func.func @transform_3(%arg0: i32) -> (i32, i32) {
    %c0_i32 = arith.constant 0 : i32
    %c0_i32_0 = arith.constant 0 : i32
    %c0_i32_1 = arith.constant 0 : i32
    return %c0_i32, %c0_i32_0 : i32, i32
  }
  func.func @transform_4(%arg0: i32) -> (i32, i32) {
    %c0_i32 = arith.constant 0 : i32
    %c0_i32_0 = arith.constant 0 : i32
    %c0_i32_1 = arith.constant 0 : i32
    return %c0_i32, %c0_i32_0 : i32, i32
  }
  func.func @transform_5(%arg0: i32) -> (i32, i32) {
    %c0_i32 = arith.constant 0 : i32
    %c0_i32_0 = arith.constant 0 : i32
    %c0_i32_1 = arith.constant 0 : i32
    return %c0_i32, %c0_i32_0 : i32, i32
  }
  func.func @transform_6(%arg0: i32) -> (i32, i32) {
    %c0_i32 = arith.constant 0 : i32
    %c0_i32_0 = arith.constant 0 : i32
    return %arg0, %c0_i32 : i32, i32
  }
}

</mosaic_0001>

<llo_original>
// kernel: tpu_custom_call.1
$region0: #{tpu_custom_call.1}
  #allocation0 [shape = 'u32[]', space=smem, size = 0x4, offset = 0x4, fixed_abs, tag = 'smem constant byte address 0x4 - core index']
  #allocation1 [shape = 'u32[144,128]{1,0:T(1,128)}', space=vmem, size = 0x12000, scoped, tag = 'internal scratch']
  %s0 = inlined_call_operand.hbm [shape: f32[8,16,128], index: 0, kind: input, shape index: {}]
  %s1 = inlined_call_operand.hbm [shape: f32[32,128], index: 1, kind: input, shape index: {}]
  %s2 = inlined_call_operand.hbm [shape: f32[32,32], index: 2, kind: input, shape index: {}]
  %s3 = inlined_call_operand.vmem [shape: f32[1,32], index: 3, kind: input, shape index: {}]
  %s4 = inlined_call_operand.hbm [shape: f32[32,128], index: 4, kind: input, shape index: {}]
  %s5 = inlined_call_operand.vmem [shape: f32[1,128], index: 5, kind: input, shape index: {}]
  %s6 = inlined_call_operand.hbm [shape: f32[16,128], index: 6, kind: output, shape index: {}]
  %s7 = sld [smem:[#allocation0]]
  $region50: #{tpu_custom_call.1} parent=0
    _
  %s9 = ssub.s32 1, %s7
  %s10 = scalar_select 0, %s9, %s7
  $region1: #{tpu_custom_call.1} parent=0
    #allocation2 [shape = 'u8[65536]{0}', space=vmem, size = 0x10000, scoped, tag = 'input window, operand 0, single buffered']
    #allocation3 [shape = 's32[1]{0}', space=sflag, size = 0x4, scoped, tag = 'scoped memory for tpu_custom_call.1']
    #allocation4 [shape = 's32[1]{0}', space=sflag, size = 0x4, scoped, tag = 'scoped memory for tpu_custom_call.1']
    #allocation5 [shape = 'u8[16384]{0}', space=vmem, size = 0x4000, scoped, tag = 'input window, operand 1, single buffered']
    #allocation6 [shape = 's32[1]{0}', space=sflag, size = 0x4, scoped, tag = 'scoped memory for tpu_custom_call.1']
    #allocation7 [shape = 'u8[16384]{0}', space=vmem, size = 0x4000, scoped, tag = 'input window, operand 2, single buffered']
    #allocation8 [shape = 'u8[16384]{0}', space=vmem, size = 0x4000, scoped, tag = 'input window, operand 4, single buffered']
    #allocation9 [shape = 's32[1]{0}', space=sflag, size = 0x4, scoped, tag = 'scoped memory for tpu_custom_call.1']
    #allocation10 [shape = 'u8[8192]{0}', space=vmem, size = 0x2000, scoped, tag = 'output window, operand 0, single buffered']
    %11 = vsyncpa [#allocation3], 0
    %12 = vsyncpa [#allocation6], 0
    %13 = vsyncpa [#allocation9], 0
    %14 = vsyncpa [#allocation4], 0
    // Predicated region
    $region2: #{tpu_custom_call.1} parent=1 // pred_check
      _
    $region3: #{tpu_custom_call.1} parent=1 // pred_check_branch
      %16 = sbr.rel (0) target = $region5
    $region4: #{tpu_custom_call.1} parent=1 // pred_region
      %s18 = ssub.s32 2048, 2048
      %19 = vsyncadd [#allocation3], %s18
      %s20 = sshll.u32 [#allocation2], 4
      %s21 = int_to_ptr.vmem [resolvable:$true] %s20
      %26 = dma.hbm_to_vmem [thread:$0]  %s0, 2048, %s21, [#allocation3], 128, 128, 8
    $region5: #{tpu_custom_call.1} parent=1 // pred_fallthru
      _
    // Predicated region
    $region6: #{tpu_custom_call.1} parent=1 // pred_check
      _
    $region7: #{tpu_custom_call.1} parent=1 // pred_check_branch
      %28 = sbr.rel (0) target = $region9
    $region8: #{tpu_custom_call.1} parent=1 // pred_region
      %s30 = ssub.s32 512, 512
      %31 = vsyncadd [#allocation6], %s30
      %s32 = sshll.u32 [#allocation5], 4
      %s33 = int_to_ptr.vmem [resolvable:$true] %s32
      %38 = dma.hbm_to_vmem [thread:$0]  %s1, 512, %s33, [#allocation6], 128, 128, 8
    $region9: #{tpu_custom_call.1} parent=1 // pred_fallthru
      _
    // Predicated region
    $region10: #{tpu_custom_call.1} parent=1 // pred_check
      _
    $region11: #{tpu_custom_call.1} parent=1 // pred_check_branch
      %40 = sbr.rel (0) target = $region13
    $region12: #{tpu_custom_call.1} parent=1 // pred_region
      %s42 = ssub.s32 512, 512
      %43 = vsyncadd [#allocation6], %s42
      %s44 = sshll.u32 [#allocation7], 4
      %s45 = int_to_ptr.vmem [resolvable:$true] %s44
      %50 = dma.hbm_to_vmem [thread:$0]  %s2, 512, %s45, [#allocation6], 128, 128, 8
    $region13: #{tpu_custom_call.1} parent=1 // pred_fallthru
      _
    // Predicated region
    $region14: #{tpu_custom_call.1} parent=1 // pred_check
      _
    $region15: #{tpu_custom_call.1} parent=1 // pred_check_branch
      %52 = sbr.rel (0) target = $region17
    $region16: #{tpu_custom_call.1} parent=1 // pred_region
      _
    $region17: #{tpu_custom_call.1} parent=1 // pred_fallthru
      _
    // Predicated region
    $region18: #{tpu_custom_call.1} parent=1 // pred_check
      _
    $region19: #{tpu_custom_call.1} parent=1 // pred_check_branch
      %54 = sbr.rel (0) target = $region21
    $region20: #{tpu_custom_call.1} parent=1 // pred_region
      %s56 = ssub.s32 512, 512
      %57 = vsyncadd [#allocation9], %s56
      %s58 = sshll.u32 [#allocation8], 4
      %s59 = int_to_ptr.vmem [resolvable:$true] %s58
      %64 = dma.hbm_to_vmem [thread:$0]  %s4, 512, %s59, [#allocation9], 128, 128, 8
    $region21: #{tpu_custom_call.1} parent=1 // pred_fallthru
      _
    // Predicated region
    $region22: #{tpu_custom_call.1} parent=1 // pred_check
      _
    $region23: #{tpu_custom_call.1} parent=1 // pred_check_branch
      %66 = sbr.rel (0) target = $region25
    $region24: #{tpu_custom_call.1} parent=1 // pred_region
      _
    $region25: #{tpu_custom_call.1} parent=1 // pred_fallthru
      _
    // Predicated region
    $region26: #{tpu_custom_call.1} parent=1 // pred_check
      _
    $region27: #{tpu_custom_call.1} parent=1 // pred_check_branch
      %68 = sbr.rel (0) target = $region29
    $region28: #{tpu_custom_call.1} parent=1 // pred_region
      %69 = dma.done [#allocation3], 2048
    $region29: #{tpu_custom_call.1} parent=1 // pred_fallthru
      _
    // Predicated region
    $region30: #{tpu_custom_call.1} parent=1 // pred_check
      _
    $region31: #{tpu_custom_call.1} parent=1 // pred_check_branch
      %71 = sbr.rel (0) target = $region33
    $region32: #{tpu_custom_call.1} parent=1 // pred_region
      %72 = dma.done [#allocation6], 512
    $region33: #{tpu_custom_call.1} parent=1 // pred_fallthru
      _
    // Predicated region
    $region34: #{tpu_custom_call.1} parent=1 // pred_check
      _
    $region35: #{tpu_custom_call.1} parent=1 // pred_check_branch
      %74 = sbr.rel (0) target = $region37
    $region36: #{tpu_custom_call.1} parent=1 // pred_region
      %75 = dma.done [#allocation6], 512
    $region37: #{tpu_custom_call.1} parent=1 // pred_fallthru
      _
    // Predicated region
    $region38: #{tpu_custom_call.1} parent=1 // pred_check
      _
    $region39: #{tpu_custom_call.1} parent=1 // pred_check_branch
      %77 = sbr.rel (0) target = $region41
    $region40: #{tpu_custom_call.1} parent=1 // pred_region
      %78 = dma.done [#allocation9], 512
    $region41: #{tpu_custom_call.1} parent=1 // pred_fallthru
      _
    %v79 = vld [vmem:[#allocation5] sm:$0xff]
    %v80 = vld [vmem:[#allocation5 + $0x8] sm:$0xff]
    %v81 = vld [vmem:[#allocation5 + $0x10] sm:$0xff]
    %v82 = vld [vmem:[#allocation5 + $0x18] sm:$0xff]
    %v83 = vld [vmem:[#allocation2] sm:$0xff]
    %v84 = vld [vmem:[#allocation2 + $0x8] sm:$0xff]
    %vm85 = vcmask 261120
    %v87 = vsel %vm85, 0.0, 0
    %89 = vmatprep.subr.mxu0 0.0
    %90 = vmatpush1.msra.mxu0 0.0
    %91 = vmatprep.subr.mxu0 0.0
    %92 = vmatpush1.msra.mxu0 0.0
    %93 = vmatprep.subr.mxu0 0.0
    %94 = vmatpush1.msra.mxu0 0.0
    %95 = vmatprep.subr.mxu0 0.0
    %96 = vmatpush1.msra.mxu0 0.0
    %97 = vmatprep.subr.mxu0 0.0
    %98 = vmatpush1.msra.mxu0 0.0
    %99 = vmatprep.subr.mxu0 0.0
    %100 = vmatpush1.msra.mxu0 0.0
    %101 = vmatprep.subr.mxu0 0.0
    %102 = vmatpush1.msra.mxu0 0.0
    %103 = vmatprep.subr.mxu0 0.0
    %104 = vmatpush1.msra.mxu0 0.0
    %105 = vmatprep.subr.mxu0 0.0
    %106 = vmatpush1.msra.mxu0 0.0
    %107 = vmatprep.subr.mxu0 0.0
    %108 = vmatpush1.msra.mxu0 0.0
    %109 = vmatprep.subr.mxu0 0.0
    %110 = vmatpush1.msra.mxu0 0.0
    %111 = vmatprep.subr.mxu0 0.0
    %112 = vmatpush1.msra.mxu0 0.0
    %113 = vmatprep.subr.mxu0 0.0
    %114 = vmatpush1.msra.mxu0 %v82
    %115 = vmatprep.subr.mxu0 0.0
    %116 = vmatpush1.msra.mxu0 %v81
    %117 = vmatprep.subr.mxu0 0.0
    %118 = vmatpush1.msra.mxu0 %v80
    %119 = vmatprep.subr.mxu0 0.0
    %120 = vmatpush1.msra.mxu0 %v79
    %121 = vmatprep.subr.mxu0 0.0
    %122 = vmatpush2.msra.mxu0 0.0
    %123 = vmatprep.subr.mxu0 0.0
    %124 = vmatpush2.msra.mxu0 0.0
    %125 = vmatprep.subr.mxu0 0.0
    %126 = vmatpush2.msra.mxu0 0.0
    %127 = vmatprep.subr.mxu0 0.0
    %128 = vmatpush2.msra.mxu0 0.0
    %129 = vmatprep.subr.mxu0 0.0
    %130 = vmatpush2.msra.mxu0 0.0
    %131 = vmatprep.subr.mxu0 0.0
    %132 = vmatpush2.msra.mxu0 0.0
    %133 = vmatprep.subr.mxu0 0.0
    %134 = vmatpush2.msra.mxu0 0.0
    %135 = vmatprep.subr.mxu0 0.0
    %136 = vmatpush2.msra.mxu0 0.0
    %137 = vmatprep.subr.mxu0 0.0
    %138 = vmatpush2.msra.mxu0 0.0
    %139 = vmatprep.subr.mxu0 0.0
    %140 = vmatpush2.msra.mxu0 0.0
    %141 = vmatprep.subr.mxu0 0.0
    %142 = vmatpush2.msra.mxu0 0.0
    %143 = vmatprep.subr.mxu0 0.0
    %144 = vmatpush2.msra.mxu0 0.0
    %145 = vmatprep.subr.mxu0 0.0
    %146 = vmatpush2.msra.mxu0 0.0
    %147 = vmatprep.subr.mxu0 0.0
    %148 = vmatpush2.msra.mxu0 0.0
    %149 = vmatprep.subr.mxu0 0.0
    %150 = vmatpush2.msra.mxu0 0.0
    %151 = vmatprep.subr.mxu0 0.0
    %152 = vmatpush2.msra.mxu0 0.0
    %153 = vmatprep.mubr.f32.mxu0 0.0
    %154 = vmatmul.mubr.f32.gmra.mxu0 %v87
    %v155 = vpop.f32.mrf.mxu0
    %v156 = vadd.f32 0.0, %v155
    %v157 = vpop.f32.mrf.mxu0
    %158 = vmatprep.mubr.f32.mxu0 0.0
    %159 = vmatmul.mubr.f32.gmra.mxu0 %v87
    %v160 = vpop.f32.mrf.mxu0
    %v161 = vadd.f32 0.0, %v160
    %v162 = vpop.f32.mrf.mxu0
    %163 = vdwg.mxu0
    %v164 = vadd.f32 %v83, %v156
    %v165 = vadd.f32 %v84, %v161
    %v166 = vxor.u32 %v164, 2147483648
    %v167 = vxor.u32 %v165, 2147483648
    %v168 = vmul.f32 %v166, 1.442695
    %v169 = vpow.pop %v168
    %v170 = vmul.f32 %v167, 1.442695
    %v171 = vpow.pop %v170
    %v172 = vadd.f32 %v169, 1.0
    %v173 = vadd.f32 %v171, 1.0
    %v174 = vrcp.pop %v172
    %v175 = vmul.f32 1.0, %v174
    %v176 = vrcp.pop %v173
    %v177 = vmul.f32 1.0, %v176
    %v178 = vtanh.pop %v164
    %v179 = vtanh.pop %v165
    %v180 = vmul.f32 %v175, 0.0
    %v181 = vmul.f32 %v177, 0.0
    %184 = vrot.lane.b32.xlu0 %v178, 64
    %v185 = vpop.permute.xlu0 %184
    %186 = vrot.lane.b32.xlu0 %v179, 64
    %v187 = vpop.permute.xlu0 %186
    %v190 = vmul.f32 %v175, %v185
    %v191 = vmul.f32 %v177, %v187
    %194 = vrot.lane.b32.xlu0 %v190, 32
    %v195 = vpop.permute.xlu0 %194
    %196 = vrot.lane.b32.xlu0 %v191, 32
    %v197 = vpop.permute.xlu0 %196
    %v200 = vadd.f32 %v180, %v195
    %v201 = vadd.f32 %v181, %v197
    %v202 = vtanh.pop %v200
    %v203 = vtanh.pop %v201
    %206 = vrot.lane.b32.xlu0 %v202, 64
    %v207 = vpop.permute.xlu0 %206
    %208 = vrot.lane.b32.xlu0 %v203, 64
    %v209 = vpop.permute.xlu0 %208
    %v212 = vmul.f32 %v175, %v207
    %v213 = vmul.f32 %v177, %v209
    %s214 = scalar_lea.vmem [#allocation2], 16
    %v215 = vld [vmem:[%s214] sm:$0xff]
    %v216 = vld [vmem:[%s214 + $0x8] sm:$0xff]
    %219 = vrot.lane.b32.xlu0 %v212, 32
    %v220 = vpop.permute.xlu0 %219
    %221 = vrot.lane.b32.xlu0 %v213, 32
    %v222 = vpop.permute.xlu0 %221
    %v223 = vsel %vm85, %v220, 0
    %v225 = vsel %vm85, %v222, 0
    %227 = vmatprep.subr.mxu0 0.0
    %228 = vmatpush1.msra.mxu0 0.0
    %229 = vmatprep.subr.mxu0 0.0
    %230 = vmatpush1.msra.mxu0 0.0
    %231 = vmatprep.subr.mxu0 0.0
    %232 = vmatpush1.msra.mxu0 0.0
    %233 = vmatprep.subr.mxu0 0.0
    %234 = vmatpush1.msra.mxu0 0.0
    %235 = vmatprep.subr.mxu0 0.0
    %236 = vmatpush1.msra.mxu0 0.0
    %237 = vmatprep.subr.mxu0 0.0
    %238 = vmatpush1.msra.mxu0 0.0
    %239 = vmatprep.subr.mxu0 0.0
    %240 = vmatpush1.msra.mxu0 0.0
    %241 = vmatprep.subr.mxu0 0.0
    %242 = vmatpush1.msra.mxu0 0.0
    %243 = vmatprep.subr.mxu0 0.0
    %244 = vmatpush1.msra.mxu0 0.0
    %245 = vmatprep.subr.mxu0 0.0
    %246 = vmatpush1.msra.mxu0 0.0
    %247 = vmatprep.subr.mxu0 0.0
    %248 = vmatpush1.msra.mxu0 0.0
    %249 = vmatprep.subr.mxu0 0.0
    %250 = vmatpush1.msra.mxu0 0.0
    %251 = vmatprep.subr.mxu0 0.0
    %252 = vmatpush1.msra.mxu0 %v82
    %253 = vmatprep.subr.mxu0 0.0
    %254 = vmatpush1.msra.mxu0 %v81
    %255 = vmatprep.subr.mxu0 0.0
    %256 = vmatpush1.msra.mxu0 %v80
    %257 = vmatprep.subr.mxu0 0.0
    %258 = vmatpush1.msra.mxu0 %v79
    %259 = vmatprep.subr.mxu0 0.0
    %260 = vmatpush2.msra.mxu0 0.0
    %261 = vmatprep.subr.mxu0 0.0
    %262 = vmatpush2.msra.mxu0 0.0
    %263 = vmatprep.subr.mxu0 0.0
    %264 = vmatpush2.msra.mxu0 0.0
    %265 = vmatprep.subr.mxu0 0.0
    %266 = vmatpush2.msra.mxu0 0.0
    %267 = vmatprep.subr.mxu0 0.0
    %268 = vmatpush2.msra.mxu0 0.0
    %269 = vmatprep.subr.mxu0 0.0
    %270 = vmatpush2.msra.mxu0 0.0
    %271 = vmatprep.subr.mxu0 0.0
    %272 = vmatpush2.msra.mxu0 0.0
    %273 = vmatprep.subr.mxu0 0.0
    %274 = vmatpush2.msra.mxu0 0.0
    %275 = vmatprep.subr.mxu0 0.0
    %276 = vmatpush2.msra.mxu0 0.0
    %277 = vmatprep.subr.mxu0 0.0
    %278 = vmatpush2.msra.mxu0 0.0
    %279 = vmatprep.subr.mxu0 0.0
    %280 = vmatpush2.msra.mxu0 0.0
    %281 = vmatprep.subr.mxu0 0.0
    %282 = vmatpush2.msra.mxu0 0.0
    %283 = vmatprep.subr.mxu0 0.0
    %284 = vmatpush2.msra.mxu0 0.0
    %285 = vmatprep.subr.mxu0 0.0
    %286 = vmatpush2.msra.mxu0 0.0
    %287 = vmatprep.subr.mxu0 0.0
    %288 = vmatpush2.msra.mxu0 0.0
    %289 = vmatprep.subr.mxu0 0.0
    %290 = vmatpush2.msra.mxu0 0.0
    %291 = vmatprep.mubr.f32.mxu0 0.0
    %292 = vmatmul.mubr.f32.gmra.mxu0 %v223
    %v293 = vpop.f32.mrf.mxu0
    %v294 = vadd.f32 0.0, %v293
    %v295 = vpop.f32.mrf.mxu0
    %296 = vmatprep.mubr.f32.mxu0 0.0
    %297 = vmatmul.mubr.f32.gmra.mxu0 %v225
    %v298 = vpop.f32.mrf.mxu0
    %v299 = vadd.f32 0.0, %v298
    %v300 = vpop.f32.mrf.mxu0
    %301 = vdwg.mxu0
    %v302 = vadd.f32 %v215, %v294
    %v303 = vadd.f32 %v216, %v299
    %v304 = vxor.u32 %v302, 2147483648
    %v305 = vxor.u32 %v303, 2147483648
    %v306 = vmul.f32 %v304, 1.442695
    %v307 = vpow.pop %v306
    %v308 = vmul.f32 %v305, 1.442695
    %v309 = vpow.pop %v308
    %v310 = vadd.f32 %v307, 1.0
    %v311 = vadd.f32 %v309, 1.0
    %v312 = vrcp.pop %v310
    %v313 = vmul.f32 1.0, %v312
    %v314 = vrcp.pop %v311
    %v315 = vmul.f32 1.0, %v314
    %v316 = vtanh.pop %v302
    %v317 = vtanh.pop %v303
    %v318 = vmul.f32 %v313, %v200
    %v319 = vmul.f32 %v315, %v201
    %322 = vrot.lane.b32.xlu0 %v316, 64
    %v323 = vpop.permute.xlu0 %322
    %324 = vrot.lane.b32.xlu0 %v317, 64
    %v325 = vpop.permute.xlu0 %324
    %v328 = vmul.f32 %v313, %v323
    %v329 = vmul.f32 %v315, %v325
    %332 = vrot.lane.b32.xlu0 %v328, 32
    %v333 = vpop.permute.xlu0 %332
    %334 = vrot.lane.b32.xlu0 %v329, 32
    %v335 = vpop.permute.xlu0 %334
    %v338 = vadd.f32 %v318, %v333
    %v339 = vadd.f32 %v319, %v335
    %v340 = vtanh.pop %v338
    %v341 = vtanh.pop %v339
    %344 = vrot.lane.b32.xlu0 %v340, 64
    %v345 = vpop.permute.xlu0 %344
    %346 = vrot.lane.b32.xlu0 %v341, 64
    %v347 = vpop.permute.xlu0 %346
    %v350 = vmul.f32 %v313, %v345
    %v351 = vmul.f32 %v315, %v347
    %s352 = scalar_lea.vmem [#allocation2], 32
    %v353 = vld [vmem:[%s352] sm:$0xff]
    %v354 = vld [vmem:[%s352 + $0x8] sm:$0xff]
    %357 = vrot.lane.b32.xlu0 %v350, 32
    %v358 = vpop.permute.xlu0 %357
    %359 = vrot.lane.b32.xlu0 %v351, 32
    %v360 = vpop.permute.xlu0 %359
    %v361 = vsel %vm85, %v358, 0
    %v363 = vsel %vm85, %v360, 0
    %365 = vmatprep.subr.mxu0 0.0
    %366 = vmatpush1.msra.mxu0 0.0
    %367 = vmatprep.subr.mxu0 0.0
    %368 = vmatpush1.msra.mxu0 0.0
    %369 = vmatprep.subr.mxu0 0.0
    %370 = vmatpush1.msra.mxu0 0.0
    %371 = vmatprep.subr.mxu0 0.0
    %372 = vmatpush1.msra.mxu0 0.0
    %373 = vmatprep.subr.mxu0 0.0
    %374 = vmatpush1.msra.mxu0 0.0
    %375 = vmatprep.subr.mxu0 0.0
    %376 = vmatpush1.msra.mxu0 0.0
    %377 = vmatprep.subr.mxu0 0.0
    %378 = vmatpush1.msra.mxu0 0.0
    %379 = vmatprep.subr.mxu0 0.0
    %380 = vmatpush1.msra.mxu0 0.0
    %381 = vmatprep.subr.mxu0 0.0
    %382 = vmatpush1.msra.mxu0 0.0
    %383 = vmatprep.subr.mxu0 0.0
    %384 = vmatpush1.msra.mxu0 0.0
    %385 = vmatprep.subr.mxu0 0.0
    %386 = vmatpush1.msra.mxu0 0.0
    %387 = vmatprep.subr.mxu0 0.0
    %388 = vmatpush1.msra.mxu0 0.0
    %389 = vmatprep.subr.mxu0 0.0
    %390 = vmatpush1.msra.mxu0 %v82
    %391 = vmatprep.subr.mxu0 0.0
    %392 = vmatpush1.msra.mxu0 %v81
    %393 = vmatprep.subr.mxu0 0.0
    %394 = vmatpush1.msra.mxu0 %v80
    %395 = vmatprep.subr.mxu0 0.0
    %396 = vmatpush1.msra.mxu0 %v79
    %397 = vmatprep.subr.mxu0 0.0
    %398 = vmatpush2.msra.mxu0 0.0
    %399 = vmatprep.subr.mxu0 0.0
    %400 = vmatpush2.msra.mxu0 0.0
    %401 = vmatprep.subr.mxu0 0.0
    %402 = vmatpush2.msra.mxu0 0.0
    %403 = vmatprep.subr.mxu0 0.0
    %404 = vmatpush2.msra.mxu0 0.0
    %405 = vmatprep.subr.mxu0 0.0
    %406 = vmatpush2.msra.mxu0 0.0
    %407 = vmatprep.subr.mxu0 0.0
    %408 = vmatpush2.msra.mxu0 0.0
    %409 = vmatprep.subr.mxu0 0.0
    %410 = vmatpush2.msra.mxu0 0.0
    %411 = vmatprep.subr.mxu0 0.0
    %412 = vmatpush2.msra.mxu0 0.0
    %413 = vmatprep.subr.mxu0 0.0
    %414 = vmatpush2.msra.mxu0 0.0
    %415 = vmatprep.subr.mxu0 0.0
    %416 = vmatpush2.msra.mxu0 0.0
    %417 = vmatprep.subr.mxu0 0.0
    %418 = vmatpush2.msra.mxu0 0.0
    %419 = vmatprep.subr.mxu0 0.0
    %420 = vmatpush2.msra.mxu0 0.0
    %421 = vmatprep.subr.mxu0 0.0
    %422 = vmatpush2.msra.mxu0 0.0
    %423 = vmatprep.subr.mxu0 0.0
    %424 = vmatpush2.msra.mxu0 0.0
    %425 = vmatprep.subr.mxu0 0.0
    %426 = vmatpush2.msra.mxu0 0.0
    %427 = vmatprep.subr.mxu0 0.0
    %428 = vmatpush2.msra.mxu0 0.0
    %429 = vmatprep.mubr.f32.mxu0 0.0
    %430 = vmatmul.mubr.f32.gmra.mxu0 %v361
    %v431 = vpop.f32.mrf.mxu0
    %v432 = vadd.f32 0.0, %v431
    %v433 = vpop.f32.mrf.mxu0
    %434 = vmatprep.mubr.f32.mxu0 0.0
    %435 = vmatmul.mubr.f32.gmra.mxu0 %v363
    %v436 = vpop.f32.mrf.mxu0
    %v437 = vadd.f32 0.0, %v436
    %v438 = vpop.f32.mrf.mxu0
    %439 = vdwg.mxu0
    %v440 = vadd.f32 %v353, %v432
    %v441 = vadd.f32 %v354, %v437
    %v442 = vxor.u32 %v440, 2147483648
    %v443 = vxor.u32 %v441, 2147483648
    %v444 = vmul.f32 %v442, 1.442695
    %v445 = vpow.pop %v444
    %v446 = vmul.f32 %v443, 1.442695
    %v447 = vpow.pop %v446
    %v448 = vadd.f32 %v445, 1.0
    %v449 = vadd.f32 %v447, 1.0
    %v450 = vrcp.pop %v448
    %v451 = vmul.f32 1.0, %v450
    %v452 = vrcp.pop %v449
    %v453 = vmul.f32 1.0, %v452
    %v454 = vtanh.pop %v440
    %v455 = vtanh.pop %v441
    %v456 = vmul.f32 %v451, %v338
    %v457 = vmul.f32 %v453, %v339
    %460 = vrot.lane.b32.xlu0 %v454, 64
    %v461 = vpop.permute.xlu0 %460
    %462 = vrot.lane.b32.xlu0 %v455, 64
    %v463 = vpop.permute.xlu0 %462
    %v466 = vmul.f32 %v451, %v461
    %v467 = vmul.f32 %v453, %v463
    %470 = vrot.lane.b32.xlu0 %v466, 32
    %v471 = vpop.permute.xlu0 %470
    %472 = vrot.lane.b32.xlu0 %v467, 32
    %v473 = vpop.permute.xlu0 %472
    %v476 = vadd.f32 %v456, %v471
    %v477 = vadd.f32 %v457, %v473
    %v478 = vtanh.pop %v476
    %v479 = vtanh.pop %v477
    %482 = vrot.lane.b32.xlu0 %v478, 64
    %v483 = vpop.permute.xlu0 %482
    %484 = vrot.lane.b32.xlu0 %v479, 64
    %v485 = vpop.permute.xlu0 %484
    %v488 = vmul.f32 %v451, %v483
    %v489 = vmul.f32 %v453, %v485
    %s490 = scalar_lea.vmem [#allocation2], 48
    %v491 = vld [vmem:[%s490] sm:$0xff]
    %v492 = vld [vmem:[%s490 + $0x8] sm:$0xff]
    %495 = vrot.lane.b32.xlu0 %v488, 32
    %v496 = vpop.permute.xlu0 %495
    %497 = vrot.lane.b32.xlu0 %v489, 32
    %v498 = vpop.permute.xlu0 %497
    %v499 = vsel %vm85, %v496, 0
    %v501 = vsel %vm85, %v498, 0
    %503 = vmatprep.subr.mxu0 0.0
    %504 = vmatpush1.msra.mxu0 0.0
    %505 = vmatprep.subr.mxu0 0.0
    %506 = vmatpush1.msra.mxu0 0.0
    %507 = vmatprep.subr.mxu0 0.0
    %508 = vmatpush1.msra.mxu0 0.0
    %509 = vmatprep.subr.mxu0 0.0
    %510 = vmatpush1.msra.mxu0 0.0
    %511 = vmatprep.subr.mxu0 0.0
    %512 = vmatpush1.msra.mxu0 0.0
    %513 = vmatprep.subr.mxu0 0.0
    %514 = vmatpush1.msra.mxu0 0.0
    %515 = vmatprep.subr.mxu0 0.0
    %516 = vmatpush1.msra.mxu0 0.0
    %517 = vmatprep.subr.mxu0 0.0
    %518 = vmatpush1.msra.mxu0 0.0
    %519 = vmatprep.subr.mxu0 0.0
    %520 = vmatpush1.msra.mxu0 0.0
    %521 = vmatprep.subr.mxu0 0.0
    %522 = vmatpush1.msra.mxu0 0.0
    %523 = vmatprep.subr.mxu0 0.0
    %524 = vmatpush1.msra.mxu0 0.0
    %525 = vmatprep.subr.mxu0 0.0
    %526 = vmatpush1.msra.mxu0 0.0
    %527 = vmatprep.subr.mxu0 0.0
    %528 = vmatpush1.msra.mxu0 %v82
    %529 = vmatprep.subr.mxu0 0.0
    %530 = vmatpush1.msra.mxu0 %v81
    %531 = vmatprep.subr.mxu0 0.0
    %532 = vmatpush1.msra.mxu0 %v80
    %533 = vmatprep.subr.mxu0 0.0
    %534 = vmatpush1.msra.mxu0 %v79
    %535 = vmatprep.subr.mxu0 0.0
    %536 = vmatpush2.msra.mxu0 0.0
    %537 = vmatprep.subr.mxu0 0.0
    %538 = vmatpush2.msra.mxu0 0.0
    %539 = vmatprep.subr.mxu0 0.0
    %540 = vmatpush2.msra.mxu0 0.0
    %541 = vmatprep.subr.mxu0 0.0
    %542 = vmatpush2.msra.mxu0 0.0
    %543 = vmatprep.subr.mxu0 0.0
    %544 = vmatpush2.msra.mxu0 0.0
    %545 = vmatprep.subr.mxu0 0.0
    %546 = vmatpush2.msra.mxu0 0.0
    %547 = vmatprep.subr.mxu0 0.0
    %548 = vmatpush2.msra.mxu0 0.0
    %549 = vmatprep.subr.mxu0 0.0
    %550 = vmatpush2.msra.mxu0 0.0
    %551 = vmatprep.subr.mxu0 0.0
    %552 = vmatpush2.msra.mxu0 0.0
    %553 = vmatprep.subr.mxu0 0.0
    %554 = vmatpush2.msra.mxu0 0.0
    %555 = vmatprep.subr.mxu0 0.0
    %556 = vmatpush2.msra.mxu0 0.0
    %557 = vmatprep.subr.mxu0 0.0
    %558 = vmatpush2.msra.mxu0 0.0
    %559 = vmatprep.subr.mxu0 0.0
    %560 = vmatpush2.msra.mxu0 0.0
    %561 = vmatprep.subr.mxu0 0.0
    %562 = vmatpush2.msra.mxu0 0.0
    %563 = vmatprep.subr.mxu0 0.0
    %564 = vmatpush2.msra.mxu0 0.0
    %565 = vmatprep.subr.mxu0 0.0
    %566 = vmatpush2.msra.mxu0 0.0
    %567 = vmatprep.mubr.f32.mxu0 0.0
    %568 = vmatmul.mubr.f32.gmra.mxu0 %v499
    %v569 = vpop.f32.mrf.mxu0
    %v570 = vadd.f32 0.0, %v569
    %v571 = vpop.f32.mrf.mxu0
    %572 = vmatprep.mubr.f32.mxu0 0.0
    %573 = vmatmul.mubr.f32.gmra.mxu0 %v501
    %v574 = vpop.f32.mrf.mxu0
    %v575 = vadd.f32 0.0, %v574
    %v576 = vpop.f32.mrf.mxu0
    %577 = vdwg.mxu0
    %v578 = vadd.f32 %v491, %v570
    %v579 = vadd.f32 %v492, %v575
    %v580 = vxor.u32 %v578, 2147483648
    %v581 = vxor.u32 %v579, 2147483648
    %v582 = vmul.f32 %v580, 1.442695
    %v583 = vpow.pop %v582
    %v584 = vmul.f32 %v581, 1.442695
    %v585 = vpow.pop %v584
    %v586 = vadd.f32 %v583, 1.0
    %v587 = vadd.f32 %v585, 1.0
    %v588 = vrcp.pop %v586
    %v589 = vmul.f32 1.0, %v588
    %v590 = vrcp.pop %v587
    %v591 = vmul.f32 1.0, %v590
    %v592 = vtanh.pop %v578
    %v593 = vtanh.pop %v579
    %v594 = vmul.f32 %v589, %v476
    %v595 = vmul.f32 %v591, %v477
    %598 = vrot.lane.b32.xlu0 %v592, 64
    %v599 = vpop.permute.xlu0 %598
    %600 = vrot.lane.b32.xlu0 %v593, 64
    %v601 = vpop.permute.xlu0 %600
    %v604 = vmul.f32 %v589, %v599
    %v605 = vmul.f32 %v591, %v601
    %608 = vrot.lane.b32.xlu0 %v604, 32
    %v609 = vpop.permute.xlu0 %608
    %610 = vrot.lane.b32.xlu0 %v605, 32
    %v611 = vpop.permute.xlu0 %610
    %v614 = vadd.f32 %v594, %v609
    %v615 = vadd.f32 %v595, %v611
    %v616 = vtanh.pop %v614
    %v617 = vtanh.pop %v615
    %620 = vrot.lane.b32.xlu0 %v616, 64
    %v621 = vpop.permute.xlu0 %620
    %622 = vrot.lane.b32.xlu0 %v617, 64
    %v623 = vpop.permute.xlu0 %622
    %v626 = vmul.f32 %v589, %v621
    %v627 = vmul.f32 %v591, %v623
    %s628 = scalar_lea.vmem [#allocation2], 64
    %v629 = vld [vmem:[%s628] sm:$0xff]
    %v630 = vld [vmem:[%s628 + $0x8] sm:$0xff]
    %633 = vrot.lane.b32.xlu0 %v626, 32
    %v634 = vpop.permute.xlu0 %633
    %635 = vrot.lane.b32.xlu0 %v627, 32
    %v636 = vpop.permute.xlu0 %635
    %v637 = vsel %vm85, %v634, 0
    %v639 = vsel %vm85, %v636, 0
    %641 = vmatprep.subr.mxu0 0.0
    %642 = vmatpush1.msra.mxu0 0.0
    %643 = vmatprep.subr.mxu0 0.0
    %644 = vmatpush1.msra.mxu0 0.0
    %645 = vmatprep.subr.mxu0 0.0
    %646 = vmatpush1.msra.mxu0 0.0
    %647 = vmatprep.subr.mxu0 0.0
    %648 = vmatpush1.msra.mxu0 0.0
    %649 = vmatprep.subr.mxu0 0.0
    %650 = vmatpush1.msra.mxu0 0.0
    %651 = vmatprep.subr.mxu0 0.0
    %652 = vmatpush1.msra.mxu0 0.0
    %653 = vmatprep.subr.mxu0 0.0
    %654 = vmatpush1.msra.mxu0 0.0
    %655 = vmatprep.subr.mxu0 0.0
    %656 = vmatpush1.msra.mxu0 0.0
    %657 = vmatprep.subr.mxu0 0.0
    %658 = vmatpush1.msra.mxu0 0.0
    %659 = vmatprep.subr.mxu0 0.0
    %660 = vmatpush1.msra.mxu0 0.0
    %661 = vmatprep.subr.mxu0 0.0
    %662 = vmatpush1.msra.mxu0 0.0
    %663 = vmatprep.subr.mxu0 0.0
    %664 = vmatpush1.msra.mxu0 0.0
    %665 = vmatprep.subr.mxu0 0.0
    %666 = vmatpush1.msra.mxu0 %v82
    %667 = vmatprep.subr.mxu0 0.0
    %668 = vmatpush1.msra.mxu0 %v81
    %669 = vmatprep.subr.mxu0 0.0
    %670 = vmatpush1.msra.mxu0 %v80
    %671 = vmatprep.subr.mxu0 0.0
    %672 = vmatpush1.msra.mxu0 %v79
    %673 = vmatprep.subr.mxu0 0.0
    %674 = vmatpush2.msra.mxu0 0.0
    %675 = vmatprep.subr.mxu0 0.0
    %676 = vmatpush2.msra.mxu0 0.0
    %677 = vmatprep.subr.mxu0 0.0
    %678 = vmatpush2.msra.mxu0 0.0
    %679 = vmatprep.subr.mxu0 0.0
    %680 = vmatpush2.msra.mxu0 0.0
    %681 = vmatprep.subr.mxu0 0.0
    %682 = vmatpush2.msra.mxu0 0.0
    %683 = vmatprep.subr.mxu0 0.0
    %684 = vmatpush2.msra.mxu0 0.0
    %685 = vmatprep.subr.mxu0 0.0
    %686 = vmatpush2.msra.mxu0 0.0
    %687 = vmatprep.subr.mxu0 0.0
    %688 = vmatpush2.msra.mxu0 0.0
    %689 = vmatprep.subr.mxu0 0.0
    %690 = vmatpush2.msra.mxu0 0.0
    %691 = vmatprep.subr.mxu0 0.0
    %692 = vmatpush2.msra.mxu0 0.0
    %693 = vmatprep.subr.mxu0 0.0
    %694 = vmatpush2.msra.mxu0 0.0
    %695 = vmatprep.subr.mxu0 0.0
    %696 = vmatpush2.msra.mxu0 0.0
    %697 = vmatprep.subr.mxu0 0.0
    %698 = vmatpush2.msra.mxu0 0.0
    %699 = vmatprep.subr.mxu0 0.0
    %700 = vmatpush2.msra.mxu0 0.0
    %701 = vmatprep.subr.mxu0 0.0
    %702 = vmatpush2.msra.mxu0 0.0
    %703 = vmatprep.subr.mxu0 0.0
    %704 = vmatpush2.msra.mxu0 0.0
    %705 = vmatprep.mubr.f32.mxu0 0.0
    %706 = vmatmul.mubr.f32.gmra.mxu0 %v637
    %v707 = vpop.f32.mrf.mxu0
    %v708 = vadd.f32 0.0, %v707
    %v709 = vpop.f32.mrf.mxu0
    %710 = vmatprep.mubr.f32.mxu0 0.0
    %711 = vmatmul.mubr.f32.gmra.mxu0 %v639
    %v712 = vpop.f32.mrf.mxu0
    %v713 = vadd.f32 0.0, %v712
    %v714 = vpop.f32.mrf.mxu0
    %715 = vdwg.mxu0
    %v716 = vadd.f32 %v629, %v708
    %v717 = vadd.f32 %v630, %v713
    %v718 = vxor.u32 %v716, 2147483648
    %v719 = vxor.u32 %v717, 2147483648
    %v720 = vmul.f32 %v718, 1.442695
    %v721 = vpow.pop %v720
    %v722 = vmul.f32 %v719, 1.442695
    %v723 = vpow.pop %v722
    %v724 = vadd.f32 %v721, 1.0
    %v725 = vadd.f32 %v723, 1.0
    %v726 = vrcp.pop %v724
    %v727 = vmul.f32 1.0, %v726
    %v728 = vrcp.pop %v725
    %v729 = vmul.f32 1.0, %v728
    %v730 = vtanh.pop %v716
    %v731 = vtanh.pop %v717
    %v732 = vmul.f32 %v727, %v614
    %v733 = vmul.f32 %v729, %v615
    %736 = vrot.lane.b32.xlu0 %v730, 64
    %v737 = vpop.permute.xlu0 %736
    %738 = vrot.lane.b32.xlu0 %v731, 64
    %v739 = vpop.permute.xlu0 %738
    %v742 = vmul.f32 %v727, %v737
    %v743 = vmul.f32 %v729, %v739
    %746 = vrot.lane.b32.xlu0 %v742, 32
    %v747 = vpop.permute.xlu0 %746
    %748 = vrot.lane.b32.xlu0 %v743, 32
    %v749 = vpop.permute.xlu0 %748
    %v752 = vadd.f32 %v732, %v747
    %v753 = vadd.f32 %v733, %v749
    %v754 = vtanh.pop %v752
    %v755 = vtanh.pop %v753
    %758 = vrot.lane.b32.xlu0 %v754, 64
    %v759 = vpop.permute.xlu0 %758
    %760 = vrot.lane.b32.xlu0 %v755, 64
    %v761 = vpop.permute.xlu0 %760
    %v764 = vmul.f32 %v727, %v759
    %v765 = vmul.f32 %v729, %v761
    %s766 = scalar_lea.vmem [#allocation2], 80
    %v767 = vld [vmem:[%s766] sm:$0xff]
    %v768 = vld [vmem:[%s766 + $0x8] sm:$0xff]
    %771 = vrot.lane.b32.xlu0 %v764, 32
    %v772 = vpop.permute.xlu0 %771
    %773 = vrot.lane.b32.xlu0 %v765, 32
    %v774 = vpop.permute.xlu0 %773
    %v775 = vsel %vm85, %v772, 0
    %v777 = vsel %vm85, %v774, 0
    %779 = vmatprep.subr.mxu0 0.0
    %780 = vmatpush1.msra.mxu0 0.0
    %781 = vmatprep.subr.mxu0 0.0
    %782 = vmatpush1.msra.mxu0 0.0
    %783 = vmatprep.subr.mxu0 0.0
    %784 = vmatpush1.msra.mxu0 0.0
    %785 = vmatprep.subr.mxu0 0.0
    %786 = vmatpush1.msra.mxu0 0.0
    %787 = vmatprep.subr.mxu0 0.0
    %788 = vmatpush1.msra.mxu0 0.0
    %789 = vmatprep.subr.mxu0 0.0
    %790 = vmatpush1.msra.mxu0 0.0
    %791 = vmatprep.subr.mxu0 0.0
    %792 = vmatpush1.msra.mxu0 0.0
    %793 = vmatprep.subr.mxu0 0.0
    %794 = vmatpush1.msra.mxu0 0.0
    %795 = vmatprep.subr.mxu0 0.0
    %796 = vmatpush1.msra.mxu0 0.0
    %797 = vmatprep.subr.mxu0 0.0
    %798 = vmatpush1.msra.mxu0 0.0
    %799 = vmatprep.subr.mxu0 0.0
    %800 = vmatpush1.msra.mxu0 0.0
    %801 = vmatprep.subr.mxu0 0.0
    %802 = vmatpush1.msra.mxu0 0.0
    %803 = vmatprep.subr.mxu0 0.0
    %804 = vmatpush1.msra.mxu0 %v82
    %805 = vmatprep.subr.mxu0 0.0
    %806 = vmatpush1.msra.mxu0 %v81
    %807 = vmatprep.subr.mxu0 0.0
    %808 = vmatpush1.msra.mxu0 %v80
    %809 = vmatprep.subr.mxu0 0.0
    %810 = vmatpush1.msra.mxu0 %v79
    %811 = vmatprep.subr.mxu0 0.0
    %812 = vmatpush2.msra.mxu0 0.0
    %813 = vmatprep.subr.mxu0 0.0
    %814 = vmatpush2.msra.mxu0 0.0
    %815 = vmatprep.subr.mxu0 0.0
    %816 = vmatpush2.msra.mxu0 0.0
    %817 = vmatprep.subr.mxu0 0.0
    %818 = vmatpush2.msra.mxu0 0.0
    %819 = vmatprep.subr.mxu0 0.0
    %820 = vmatpush2.msra.mxu0 0.0
    %821 = vmatprep.subr.mxu0 0.0
    %822 = vmatpush2.msra.mxu0 0.0
    %823 = vmatprep.subr.mxu0 0.0
    %824 = vmatpush2.msra.mxu0 0.0
    %825 = vmatprep.subr.mxu0 0.0
    %826 = vmatpush2.msra.mxu0 0.0
    %827 = vmatprep.subr.mxu0 0.0
    %828 = vmatpush2.msra.mxu0 0.0
    %829 = vmatprep.subr.mxu0 0.0
    %830 = vmatpush2.msra.mxu0 0.0
    %831 = vmatprep.subr.mxu0 0.0
    %832 = vmatpush2.msra.mxu0 0.0
    %833 = vmatprep.subr.mxu0 0.0
    %834 = vmatpush2.msra.mxu0 0.0
    %835 = vmatprep.subr.mxu0 0.0
    %836 = vmatpush2.msra.mxu0 0.0
    %837 = vmatprep.subr.mxu0 0.0
    %838 = vmatpush2.msra.mxu0 0.0
    %839 = vmatprep.subr.mxu0 0.0
    %840 = vmatpush2.msra.mxu0 0.0
    %841 = vmatprep.subr.mxu0 0.0
    %842 = vmatpush2.msra.mxu0 0.0
    %843 = vmatprep.mubr.f32.mxu0 0.0
    %844 = vmatmul.mubr.f32.gmra.mxu0 %v775
    %v845 = vpop.f32.mrf.mxu0
    %v846 = vadd.f32 0.0, %v845
    %v847 = vpop.f32.mrf.mxu0
    %848 = vmatprep.mubr.f32.mxu0 0.0
    %849 = vmatmul.mubr.f32.gmra.mxu0 %v777
    %v850 = vpop.f32.mrf.mxu0
    %v851 = vadd.f32 0.0, %v850
    %v852 = vpop.f32.mrf.mxu0
    %853 = vdwg.mxu0
    %v854 = vadd.f32 %v767, %v846
    %v855 = vadd.f32 %v768, %v851
    %v856 = vxor.u32 %v854, 2147483648
    %v857 = vxor.u32 %v855, 2147483648
    %v858 = vmul.f32 %v856, 1.442695
    %v859 = vpow.pop %v858
    %v860 = vmul.f32 %v857, 1.442695
    %v861 = vpow.pop %v860
    %v862 = vadd.f32 %v859, 1.0
    %v863 = vadd.f32 %v861, 1.0
    %v864 = vrcp.pop %v862
    %v865 = vmul.f32 1.0, %v864
    %v866 = vrcp.pop %v863
    %v867 = vmul.f32 1.0, %v866
    %v868 = vtanh.pop %v854
    %v869 = vtanh.pop %v855
    %v870 = vmul.f32 %v865, %v752
    %v871 = vmul.f32 %v867, %v753
    %874 = vrot.lane.b32.xlu0 %v868, 64
    %v875 = vpop.permute.xlu0 %874
    %876 = vrot.lane.b32.xlu0 %v869, 64
    %v877 = vpop.permute.xlu0 %876
    %v880 = vmul.f32 %v865, %v875
    %v881 = vmul.f32 %v867, %v877
    %884 = vrot.lane.b32.xlu0 %v880, 32
    %v885 = vpop.permute.xlu0 %884
    %886 = vrot.lane.b32.xlu0 %v881, 32
    %v887 = vpop.permute.xlu0 %886
    %v890 = vadd.f32 %v870, %v885
    %v891 = vadd.f32 %v871, %v887
    %v892 = vtanh.pop %v890
    %v893 = vtanh.pop %v891
    %896 = vrot.lane.b32.xlu0 %v892, 64
    %v897 = vpop.permute.xlu0 %896
    %898 = vrot.lane.b32.xlu0 %v893, 64
    %v899 = vpop.permute.xlu0 %898
    %v902 = vmul.f32 %v865, %v897
    %v903 = vmul.f32 %v867, %v899
    %s904 = scalar_lea.vmem [#allocation2], 96
    %v905 = vld [vmem:[%s904] sm:$0xff]
    %v906 = vld [vmem:[%s904 + $0x8] sm:$0xff]
    %909 = vrot.lane.b32.xlu0 %v902, 32
    %v910 = vpop.permute.xlu0 %909
    %911 = vrot.lane.b32.xlu0 %v903, 32
    %v912 = vpop.permute.xlu0 %911
    %v913 = vsel %vm85, %v910, 0
    %v915 = vsel %vm85, %v912, 0
    %917 = vmatprep.subr.mxu0 0.0
    %918 = vmatpush1.msra.mxu0 0.0
    %919 = vmatprep.subr.mxu0 0.0
    %920 = vmatpush1.msra.mxu0 0.0
    %921 = vmatprep.subr.mxu0 0.0
    %922 = vmatpush1.msra.mxu0 0.0
    %923 = vmatprep.subr.mxu0 0.0
    %924 = vmatpush1.msra.mxu0 0.0
    %925 = vmatprep.subr.mxu0 0.0
    %926 = vmatpush1.msra.mxu0 0.0
    %927 = vmatprep.subr.mxu0 0.0
    %928 = vmatpush1.msra.mxu0 0.0
    %929 = vmatprep.subr.mxu0 0.0
    %930 = vmatpush1.msra.mxu0 0.0
    %931 = vmatprep.subr.mxu0 0.0
    %932 = vmatpush1.msra.mxu0 0.0
    %933 = vmatprep.subr.mxu0 0.0
    %934 = vmatpush1.msra.mxu0 0.0
    %935 = vmatprep.subr.mxu0 0.0
    %936 = vmatpush1.msra.mxu0 0.0
    %937 = vmatprep.subr.mxu0 0.0
    %938 = vmatpush1.msra.mxu0 0.0
    %939 = vmatprep.subr.mxu0 0.0
    %940 = vmatpush1.msra.mxu0 0.0
    %941 = vmatprep.subr.mxu0 0.0
    %942 = vmatpush1.msra.mxu0 %v82
    %943 = vmatprep.subr.mxu0 0.0
    %944 = vmatpush1.msra.mxu0 %v81
    %945 = vmatprep.subr.mxu0 0.0
    %946 = vmatpush1.msra.mxu0 %v80
    %947 = vmatprep.subr.mxu0 0.0
    %948 = vmatpush1.msra.mxu0 %v79
    %949 = vmatprep.subr.mxu0 0.0
    %950 = vmatpush2.msra.mxu0 0.0
    %951 = vmatprep.subr.mxu0 0.0
    %952 = vmatpush2.msra.mxu0 0.0
    %953 = vmatprep.subr.mxu0 0.0
    %954 = vmatpush2.msra.mxu0 0.0
    %955 = vmatprep.subr.mxu0 0.0
    %956 = vmatpush2.msra.mxu0 0.0
    %957 = vmatprep.subr.mxu0 0.0
    %958 = vmatpush2.msra.mxu0 0.0
    %959 = vmatprep.subr.mxu0 0.0
    %960 = vmatpush2.msra.mxu0 0.0
    %961 = vmatprep.subr.mxu0 0.0
    %962 = vmatpush2.msra.mxu0 0.0
    %963 = vmatprep.subr.mxu0 0.0
    %964 = vmatpush2.msra.mxu0 0.0
    %965 = vmatprep.subr.mxu0 0.0
    %966 = vmatpush2.msra.mxu0 0.0
    %967 = vmatprep.subr.mxu0 0.0
    %968 = vmatpush2.msra.mxu0 0.0
    %969 = vmatprep.subr.mxu0 0.0
    %970 = vmatpush2.msra.mxu0 0.0
    %971 = vmatprep.subr.mxu0 0.0
    %972 = vmatpush2.msra.mxu0 0.0
    %973 = vmatprep.subr.mxu0 0.0
    %974 = vmatpush2.msra.mxu0 0.0
    %975 = vmatprep.subr.mxu0 0.0
    %976 = vmatpush2.msra.mxu0 0.0
    %977 = vmatprep.subr.mxu0 0.0
    %978 = vmatpush2.msra.mxu0 0.0
    %979 = vmatprep.subr.mxu0 0.0
    %980 = vmatpush2.msra.mxu0 0.0
    %981 = vmatprep.mubr.f32.mxu0 0.0
    %982 = vmatmul.mubr.f32.gmra.mxu0 %v913
    %v983 = vpop.f32.mrf.mxu0
    %v984 = vadd.f32 0.0, %v983
    %v985 = vpop.f32.mrf.mxu0
    %986 = vmatprep.mubr.f32.mxu0 0.0
    %987 = vmatmul.mubr.f32.gmra.mxu0 %v915
    %v988 = vpop.f32.mrf.mxu0
    %v989 = vadd.f32 0.0, %v988
    %v990 = vpop.f32.mrf.mxu0
    %991 = vdwg.mxu0
    %v992 = vadd.f32 %v905, %v984
    %v993 = vadd.f32 %v906, %v989
    %v994 = vxor.u32 %v992, 2147483648
    %v995 = vxor.u32 %v993, 2147483648
    %v996 = vmul.f32 %v994, 1.442695
    %v997 = vpow.pop %v996
    %v998 = vmul.f32 %v995, 1.442695
    %v999 = vpow.pop %v998
    %v1000 = vadd.f32 %v997, 1.0
    %v1001 = vadd.f32 %v999, 1.0
    %v1002 = vrcp.pop %v1000
    %v1003 = vmul.f32 1.0, %v1002
    %v1004 = vrcp.pop %v1001
    %v1005 = vmul.f32 1.0, %v1004
    %v1006 = vtanh.pop %v992
    %v1007 = vtanh.pop %v993
    %v1008 = vmul.f32 %v1003, %v890
    %v1009 = vmul.f32 %v1005, %v891
    %1012 = vrot.lane.b32.xlu0 %v1006, 64
    %v1013 = vpop.permute.xlu0 %1012
    %1014 = vrot.lane.b32.xlu0 %v1007, 64
    %v1015 = vpop.permute.xlu0 %1014
    %v1018 = vmul.f32 %v1003, %v1013
    %v1019 = vmul.f32 %v1005, %v1015
    %1022 = vrot.lane.b32.xlu0 %v1018, 32
    %v1023 = vpop.permute.xlu0 %1022
    %1024 = vrot.lane.b32.xlu0 %v1019, 32
    %v1025 = vpop.permute.xlu0 %1024
    %v1028 = vadd.f32 %v1008, %v1023
    %v1029 = vadd.f32 %v1009, %v1025
    %v1030 = vtanh.pop %v1028
    %v1031 = vtanh.pop %v1029
    %1034 = vrot.lane.b32.xlu0 %v1030, 64
    %v1035 = vpop.permute.xlu0 %1034
    %1036 = vrot.lane.b32.xlu0 %v1031, 64
    %v1037 = vpop.permute.xlu0 %1036
    %v1040 = vmul.f32 %v1003, %v1035
    %v1041 = vmul.f32 %v1005, %v1037
    %s1042 = scalar_lea.vmem [#allocation2], 112
    %v1043 = vld [vmem:[%s1042] sm:$0xff]
    %v1044 = vld [vmem:[%s1042 + $0x8] sm:$0xff]
    %1047 = vrot.lane.b32.xlu0 %v1040, 32
    %v1048 = vpop.permute.xlu0 %1047
    %1049 = vrot.lane.b32.xlu0 %v1041, 32
    %v1050 = vpop.permute.xlu0 %1049
    %v1051 = vsel %vm85, %v1048, 0
    %v1053 = vsel %vm85, %v1050, 0
    %1055 = vmatprep.subr.mxu0 0.0
    %1056 = vmatpush1.msra.mxu0 0.0
    %1057 = vmatprep.subr.mxu0 0.0
    %1058 = vmatpush1.msra.mxu0 0.0
    %1059 = vmatprep.subr.mxu0 0.0
    %1060 = vmatpush1.msra.mxu0 0.0
    %1061 = vmatprep.subr.mxu0 0.0
    %1062 = vmatpush1.msra.mxu0 0.0
    %1063 = vmatprep.subr.mxu0 0.0
    %1064 = vmatpush1.msra.mxu0 0.0
    %1065 = vmatprep.subr.mxu0 0.0
    %1066 = vmatpush1.msra.mxu0 0.0
    %1067 = vmatprep.subr.mxu0 0.0
    %1068 = vmatpush1.msra.mxu0 0.0
    %1069 = vmatprep.subr.mxu0 0.0
    %1070 = vmatpush1.msra.mxu0 0.0
    %1071 = vmatprep.subr.mxu0 0.0
    %1072 = vmatpush1.msra.mxu0 0.0
    %1073 = vmatprep.subr.mxu0 0.0
    %1074 = vmatpush1.msra.mxu0 0.0
    %1075 = vmatprep.subr.mxu0 0.0
    %1076 = vmatpush1.msra.mxu0 0.0
    %1077 = vmatprep.subr.mxu0 0.0
    %1078 = vmatpush1.msra.mxu0 0.0
    %1079 = vmatprep.subr.mxu0 0.0
    %1080 = vmatpush1.msra.mxu0 %v82
    %1081 = vmatprep.subr.mxu0 0.0
    %1082 = vmatpush1.msra.mxu0 %v81
    %1083 = vmatprep.subr.mxu0 0.0
    %1084 = vmatpush1.msra.mxu0 %v80
    %1085 = vmatprep.subr.mxu0 0.0
    %1086 = vmatpush1.msra.mxu0 %v79
    %1087 = vmatprep.subr.mxu0 0.0
    %1088 = vmatpush2.msra.mxu0 0.0
    %1089 = vmatprep.subr.mxu0 0.0
    %1090 = vmatpush2.msra.mxu0 0.0
    %1091 = vmatprep.subr.mxu0 0.0
    %1092 = vmatpush2.msra.mxu0 0.0
    %1093 = vmatprep.subr.mxu0 0.0
    %1094 = vmatpush2.msra.mxu0 0.0
    %1095 = vmatprep.subr.mxu0 0.0
    %1096 = vmatpush2.msra.mxu0 0.0
    %1097 = vmatprep.subr.mxu0 0.0
    %1098 = vmatpush2.msra.mxu0 0.0
    %1099 = vmatprep.subr.mxu0 0.0
    %1100 = vmatpush2.msra.mxu0 0.0
    %1101 = vmatprep.subr.mxu0 0.0
    %1102 = vmatpush2.msra.mxu0 0.0
    %1103 = vmatprep.subr.mxu0 0.0
    %1104 = vmatpush2.msra.mxu0 0.0
    %1105 = vmatprep.subr.mxu0 0.0
    %1106 = vmatpush2.msra.mxu0 0.0
    %1107 = vmatprep.subr.mxu0 0.0
    %1108 = vmatpush2.msra.mxu0 0.0
    %1109 = vmatprep.subr.mxu0 0.0
    %1110 = vmatpush2.msra.mxu0 0.0
    %1111 = vmatprep.subr.mxu0 0.0
    %1112 = vmatpush2.msra.mxu0 0.0
    %1113 = vmatprep.subr.mxu0 0.0
    %1114 = vmatpush2.msra.mxu0 0.0
    %1115 = vmatprep.subr.mxu0 0.0
    %1116 = vmatpush2.msra.mxu0 0.0
    %1117 = vmatprep.subr.mxu0 0.0
    %1118 = vmatpush2.msra.mxu0 0.0
    %1119 = vmatprep.mubr.f32.mxu0 0.0
    %1120 = vmatmul.mubr.f32.gmra.mxu0 %v1051
    %v1121 = vpop.f32.mrf.mxu0
    %v1122 = vadd.f32 0.0, %v1121
    %v1123 = vpop.f32.mrf.mxu0
    %1124 = vmatprep.mubr.f32.mxu0 0.0
    %1125 = vmatmul.mubr.f32.gmra.mxu0 %v1053
    %v1126 = vpop.f32.mrf.mxu0
    %v1127 = vadd.f32 0.0, %v1126
    %v1128 = vpop.f32.mrf.mxu0
    %1129 = vdwg.mxu0
    %v1130 = vadd.f32 %v1043, %v1122
    %v1131 = vadd.f32 %v1044, %v1127
    %v1132 = vxor.u32 %v1130, 2147483648
    %v1133 = vxor.u32 %v1131, 2147483648
    %v1134 = vmul.f32 %v1132, 1.442695
    %v1135 = vpow.pop %v1134
    %v1136 = vmul.f32 %v1133, 1.442695
    %v1137 = vpow.pop %v1136
    %v1138 = vadd.f32 %v1135, 1.0
    %v1139 = vadd.f32 %v1137, 1.0
    %v1140 = vrcp.pop %v1138
    %v1141 = vmul.f32 1.0, %v1140
    %v1142 = vrcp.pop %v1139
    %v1143 = vmul.f32 1.0, %v1142
    %v1144 = vtanh.pop %v1130
    %v1145 = vtanh.pop %v1131
    %v1146 = vmul.f32 %v1141, %v1028
    %v1147 = vmul.f32 %v1143, %v1029
    %1150 = vrot.lane.b32.xlu0 %v1144, 64
    %v1151 = vpop.permute.xlu0 %1150
    %1152 = vrot.lane.b32.xlu0 %v1145, 64
    %v1153 = vpop.permute.xlu0 %1152
    %v1156 = vmul.f32 %v1141, %v1151
    %v1157 = vmul.f32 %v1143, %v1153
    %1160 = vrot.lane.b32.xlu0 %v1156, 32
    %v1161 = vpop.permute.xlu0 %1160
    %1162 = vrot.lane.b32.xlu0 %v1157, 32
    %v1163 = vpop.permute.xlu0 %1162
    %v1166 = vadd.f32 %v1146, %v1161
    %v1167 = vadd.f32 %v1147, %v1163
    %v1168 = vtanh.pop %v1166
    %v1169 = vtanh.pop %v1167
    %1172 = vrot.lane.b32.xlu0 %v1168, 64
    %v1173 = vpop.permute.xlu0 %1172
    %1174 = vrot.lane.b32.xlu0 %v1169, 64
    %v1175 = vpop.permute.xlu0 %1174
    %v1178 = vmul.f32 %v1141, %v1173
    %v1179 = vmul.f32 %v1143, %v1175
    %v1180 = vld [vmem:[#allocation7] sm:$0xff]
    %v1181 = vld [vmem:[#allocation7 + $0x8] sm:$0xff]
    %v1182 = vld [vmem:[#allocation7 + $0x10] sm:$0xff]
    %v1183 = vld [vmem:[#allocation7 + $0x18] sm:$0xff]
    %v1184 = vld [vmem:[%s3] sm:$0x1]
    %v1186 = vlaneseq
    %v1187 = vshrl.u32 %v1186, 7
    %v1188 = vsub.s32 0, %v1187
    %v1189 = vrot.slane %v1184, %v1188
    %1193 = vrot.lane.b32.xlu0 %v1178, 32
    %v1194 = vpop.permute.xlu0 %1193
    %1195 = vrot.lane.b32.xlu0 %v1179, 32
    %v1196 = vpop.permute.xlu0 %1195
    %v1197 = vsel %vm85, %v1194, 0
    %v1199 = vsel %vm85, %v1196, 0
    %1201 = vmatprep.subr.mxu0 0.0
    %1202 = vmatpush1.msra.mxu0 0.0
    %1203 = vmatprep.subr.mxu0 0.0
    %1204 = vmatpush1.msra.mxu0 0.0
    %1205 = vmatprep.subr.mxu0 0.0
    %1206 = vmatpush1.msra.mxu0 0.0
    %1207 = vmatprep.subr.mxu0 0.0
    %1208 = vmatpush1.msra.mxu0 0.0
    %1209 = vmatprep.subr.mxu0 0.0
    %1210 = vmatpush1.msra.mxu0 0.0
    %1211 = vmatprep.subr.mxu0 0.0
    %1212 = vmatpush1.msra.mxu0 0.0
    %1213 = vmatprep.subr.mxu0 0.0
    %1214 = vmatpush1.msra.mxu0 0.0
    %1215 = vmatprep.subr.mxu0 0.0
    %1216 = vmatpush1.msra.mxu0 0.0
    %1217 = vmatprep.subr.mxu0 0.0
    %1218 = vmatpush1.msra.mxu0 0.0
    %1219 = vmatprep.subr.mxu0 0.0
    %1220 = vmatpush1.msra.mxu0 0.0
    %1221 = vmatprep.subr.mxu0 0.0
    %1222 = vmatpush1.msra.mxu0 0.0
    %1223 = vmatprep.subr.mxu0 0.0
    %1224 = vmatpush1.msra.mxu0 0.0
    %1225 = vmatprep.subr.mxu0 0.0
    %1226 = vmatpush1.msra.mxu0 %v1183
    %1227 = vmatprep.subr.mxu0 0.0
    %1228 = vmatpush1.msra.mxu0 %v1182
    %1229 = vmatprep.subr.mxu0 0.0
    %1230 = vmatpush1.msra.mxu0 %v1181
    %1231 = vmatprep.subr.mxu0 0.0
    %1232 = vmatpush1.msra.mxu0 %v1180
    %1233 = vmatprep.subr.mxu0 0.0
    %1234 = vmatpush2.msra.mxu0 0.0
    %1235 = vmatprep.subr.mxu0 0.0
    %1236 = vmatpush2.msra.mxu0 0.0
    %1237 = vmatprep.subr.mxu0 0.0
    %1238 = vmatpush2.msra.mxu0 0.0
    %1239 = vmatprep.subr.mxu0 0.0
    %1240 = vmatpush2.msra.mxu0 0.0
    %1241 = vmatprep.subr.mxu0 0.0
    %1242 = vmatpush2.msra.mxu0 0.0
    %1243 = vmatprep.subr.mxu0 0.0
    %1244 = vmatpush2.msra.mxu0 0.0
    %1245 = vmatprep.subr.mxu0 0.0
    %1246 = vmatpush2.msra.mxu0 0.0
    %1247 = vmatprep.subr.mxu0 0.0
    %1248 = vmatpush2.msra.mxu0 0.0
    %1249 = vmatprep.subr.mxu0 0.0
    %1250 = vmatpush2.msra.mxu0 0.0
    %1251 = vmatprep.subr.mxu0 0.0
    %1252 = vmatpush2.msra.mxu0 0.0
    %1253 = vmatprep.subr.mxu0 0.0
    %1254 = vmatpush2.msra.mxu0 0.0
    %1255 = vmatprep.subr.mxu0 0.0
    %1256 = vmatpush2.msra.mxu0 0.0
    %1257 = vmatprep.subr.mxu0 0.0
    %1258 = vmatpush2.msra.mxu0 0.0
    %1259 = vmatprep.subr.mxu0 0.0
    %1260 = vmatpush2.msra.mxu0 0.0
    %1261 = vmatprep.subr.mxu0 0.0
    %1262 = vmatpush2.msra.mxu0 0.0
    %1263 = vmatprep.subr.mxu0 0.0
    %1264 = vmatpush2.msra.mxu0 0.0
    %1265 = vmatprep.mubr.f32.mxu0 0.0
    %1266 = vmatmul.mubr.f32.gmra.mxu0 %v1197
    %v1267 = vpop.f32.mrf.mxu0
    %v1268 = vadd.f32 %v1189, %v1267
    %v1269 = vpop.f32.mrf.mxu0
    %1270 = vmatprep.mubr.f32.mxu0 0.0
    %1271 = vmatmul.mubr.f32.gmra.mxu0 %v1199
    %v1272 = vpop.f32.mrf.mxu0
    %v1273 = vadd.f32 %v1189, %v1272
    %v1274 = vpop.f32.mrf.mxu0
    %1275 = vdwg.mxu0
    %v1276 = vmax.f32 %v1268, 0.0
    %v1277 = vmax.f32 %v1273, 0.0
    %v1278 = vld [vmem:[#allocation8] sm:$0xff]
    %v1279 = vld [vmem:[#allocation8 + $0x8] sm:$0xff]
    %v1280 = vld [vmem:[#allocation8 + $0x10] sm:$0xff]
    %v1281 = vld [vmem:[#allocation8 + $0x18] sm:$0xff]
    %v1282 = vld [vmem:[%s5] sm:$0x1]
    %v1284 = vlaneseq
    %v1285 = vshrl.u32 %v1284, 7
    %v1286 = vsub.s32 0, %v1285
    %v1287 = vrot.slane %v1282, %v1286
    %v1290 = vsel %vm85, %v1276, 0
    %v1293 = vsel %vm85, %v1277, 0
    %1295 = vmatprep.subr.mxu0 0.0
    %1296 = vmatpush1.msra.mxu0 0.0
    %1297 = vmatprep.subr.mxu0 0.0
    %1298 = vmatpush1.msra.mxu0 0.0
    %1299 = vmatprep.subr.mxu0 0.0
    %1300 = vmatpush1.msra.mxu0 0.0
    %1301 = vmatprep.subr.mxu0 0.0
    %1302 = vmatpush1.msra.mxu0 0.0
    %1303 = vmatprep.subr.mxu0 0.0
    %1304 = vmatpush1.msra.mxu0 0.0
    %1305 = vmatprep.subr.mxu0 0.0
    %1306 = vmatpush1.msra.mxu0 0.0
    %1307 = vmatprep.subr.mxu0 0.0
    %1308 = vmatpush1.msra.mxu0 0.0
    %1309 = vmatprep.subr.mxu0 0.0
    %1310 = vmatpush1.msra.mxu0 0.0
    %1311 = vmatprep.subr.mxu0 0.0
    %1312 = vmatpush1.msra.mxu0 0.0
    %1313 = vmatprep.subr.mxu0 0.0
    %1314 = vmatpush1.msra.mxu0 0.0
    %1315 = vmatprep.subr.mxu0 0.0
    %1316 = vmatpush1.msra.mxu0 0.0
    %1317 = vmatprep.subr.mxu0 0.0
    %1318 = vmatpush1.msra.mxu0 0.0
    %1319 = vmatprep.subr.mxu0 0.0
    %1320 = vmatpush1.msra.mxu0 %v1281
    %1321 = vmatprep.subr.mxu0 0.0
    %1322 = vmatpush1.msra.mxu0 %v1280
    %1323 = vmatprep.subr.mxu0 0.0
    %1324 = vmatpush1.msra.mxu0 %v1279
    %1325 = vmatprep.subr.mxu0 0.0
    %1326 = vmatpush1.msra.mxu0 %v1278
    %1327 = vmatprep.subr.mxu0 0.0
    %1328 = vmatpush2.msra.mxu0 0.0
    %1329 = vmatprep.subr.mxu0 0.0
    %1330 = vmatpush2.msra.mxu0 0.0
    %1331 = vmatprep.subr.mxu0 0.0
    %1332 = vmatpush2.msra.mxu0 0.0
    %1333 = vmatprep.subr.mxu0 0.0
    %1334 = vmatpush2.msra.mxu0 0.0
    %1335 = vmatprep.subr.mxu0 0.0
    %1336 = vmatpush2.msra.mxu0 0.0
    %1337 = vmatprep.subr.mxu0 0.0
    %1338 = vmatpush2.msra.mxu0 0.0
    %1339 = vmatprep.subr.mxu0 0.0
    %1340 = vmatpush2.msra.mxu0 0.0
    %1341 = vmatprep.subr.mxu0 0.0
    %1342 = vmatpush2.msra.mxu0 0.0
    %1343 = vmatprep.subr.mxu0 0.0
    %1344 = vmatpush2.msra.mxu0 0.0
    %1345 = vmatprep.subr.mxu0 0.0
    %1346 = vmatpush2.msra.mxu0 0.0
    %1347 = vmatprep.subr.mxu0 0.0
    %1348 = vmatpush2.msra.mxu0 0.0
    %1349 = vmatprep.subr.mxu0 0.0
    %1350 = vmatpush2.msra.mxu0 0.0
    %1351 = vmatprep.subr.mxu0 0.0
    %1352 = vmatpush2.msra.mxu0 0.0
    %1353 = vmatprep.subr.mxu0 0.0
    %1354 = vmatpush2.msra.mxu0 0.0
    %1355 = vmatprep.subr.mxu0 0.0
    %1356 = vmatpush2.msra.mxu0 0.0
    %1357 = vmatprep.subr.mxu0 0.0
    %1358 = vmatpush2.msra.mxu0 0.0
    %1359 = vmatprep.mubr.f32.mxu0 0.0
    %1360 = vmatmul.mubr.f32.gmra.mxu0 %v1290
    %v1361 = vpop.f32.mrf.mxu0
    %v1362 = vadd.f32 %v1287, %v1361
    %v1363 = vpop.f32.mrf.mxu0
    %1364 = vmatprep.mubr.f32.mxu0 0.0
    %1365 = vmatmul.mubr.f32.gmra.mxu0 %v1293
    %v1366 = vpop.f32.mrf.mxu0
    %v1367 = vadd.f32 %v1287, %v1366
    %v1368 = vpop.f32.mrf.mxu0
    %1369 = vdwg.mxu0
    %1370 = vst [vmem:[#allocation10] sm:$0xff] %v1362
    %1371 = vst [vmem:[#allocation10 + $0x8] sm:$0xff] %v1367
    // Predicated region
    $region42: #{tpu_custom_call.1} parent=1 // pred_check
      _
    $region43: #{tpu_custom_call.1} parent=1 // pred_check_branch
      %1373 = sbr.rel (0) target = $region45
    $region44: #{tpu_custom_call.1} parent=1 // pred_region
      %s1375 = ssub.s32 256, 256
      %1376 = vsyncadd [#allocation4], %s1375
      %s1377 = sshll.u32 [#allocation10], 4
      %s1378 = int_to_ptr.vmem [resolvable:$true] %s1377
      %1383 = dma.vmem_to_hbm [thread:$0]  %s1378, 256, %s6, [#allocation4], 128, 128, 8
    $region45: #{tpu_custom_call.1} parent=1 // pred_fallthru
      _
    // Predicated region
    $region46: #{tpu_custom_call.1} parent=1 // pred_check
      _
    $region47: #{tpu_custom_call.1} parent=1 // pred_check_branch
      %1385 = sbr.rel (0) target = $region49
    $region48: #{tpu_custom_call.1} parent=1 // pred_region
      %1386 = dma.done [#allocation4], 256
    $region49: #{tpu_custom_call.1} parent=1 // pred_fallthru
      _
    %1387 = vsyncpa [#allocation3], 1
    %1388 = vsyncpa [#allocation6], 1
    %1389 = vsyncpa [#allocation9], 1
    %1390 = vsyncpa [#allocation4], 1

</llo_original>
